<compile_context>
chip_gen: v7x
topology: tpu7x:2x2x1
jax: 0.10.0
libtpu: 0.0.40
codegen_flags: <defaults>
</compile_context>

<pallas_src>
import functools

import jax
import jax.numpy as jnp
from jax.experimental import pallas as pl
from jax.experimental.pallas import tpu as pltpu

INPUT_DIM = 28 * 28          # 784 (multiple of 16 -> fine for bf16/int8 sublane tiling)
HIDDEN_DIM = 500
Z_DIM = 20

HID_PAD = 512                # 4 * 128   (500 -> 512, zero padded -> exact)
HEAD_PAD = 128               # 1 * 128   (2 * z_dim = 40 -> 128, zero padded -> exact)


def encoder_kernel(x_ref, w1_ref, s1_ref, b1_ref, wh_ref, sh_ref, bh_ref, out_ref):
    """Fused fc1+ReLU+(mean|std) forward for one row block.

    Weights arrive as int8; they are widened to bf16 (exact) for the MXU and the
    per-output-channel scale is applied to the f32 accumulator afterwards.
    """
    x = x_ref[...].astype(jnp.bfloat16)                              # [BM, 784]

    # fc1 + ReLU
    w1 = w1_ref[...].astype(jnp.float32).astype(jnp.bfloat16)        # [784, HID_PAD]
    h = jnp.dot(x, w1, preferred_element_type=jnp.float32)           # [BM, HID_PAD] f32
    h = jnp.maximum(h * s1_ref[...] + b1_ref[...], 0.0)

    # fused mean|std head -> one dense 128-lane output block
    wh = wh_ref[...].astype(jnp.float32).astype(jnp.bfloat16)        # [HID_PAD, HEAD_PAD]
    o = jnp.dot(h.astype(jnp.bfloat16), wh, preferred_element_type=jnp.float32)
    out_ref[...] = o * sh_ref[...] + bh_ref[...]                     # [BM, HEAD_PAD]


def _quantize_per_col(w):
    """Symmetric per-output-channel int8 quantisation. w: [in, out] f32."""
    amax = jnp.max(jnp.abs(w), axis=0, keepdims=True)                # [1, out]
    scale = jnp.maximum(amax, 1e-8) / 127.0
    q = jnp.clip(jnp.round(w / scale), -127, 127).astype(jnp.int8)
    return q, scale.astype(jnp.float32)


def pack_params(params, hid_pad=HID_PAD, head_pad=HEAD_PAD):
    """One-time repack: zero-pad to lane-friendly output widths, fuse the
    mean|std heads into one weight/bias, int8-quantise weights per output
    channel (scales/biases stay f32). No input-dim padding (784 kept as-is)."""
    in_dim, hidden = params["w1"].shape
    z_dim = params["wm"].shape[1]

    w1 = jnp.zeros((in_dim, hid_pad), jnp.float32)
    w1 = w1.at[:, :hidden].set(params["w1"])
    b1 = jnp.zeros((1, hid_pad), jnp.float32).at[:, :hidden].set(params["b1"])

    wh = jnp.zeros((hid_pad, head_pad), jnp.float32)
    wh = wh.at[:hidden, :z_dim].set(params["wm"])
    wh = wh.at[:hidden, z_dim:2 * z_dim].set(params["ws"])
    bh = jnp.zeros((1, head_pad), jnp.float32)
    bh = bh.at[:, :z_dim].set(params["bm"])
    bh = bh.at[:, z_dim:2 * z_dim].set(params["bs"])

    w1_q, s1 = _quantize_per_col(w1)
    wh_q, sh = _quantize_per_col(wh)

    return {
        "w1": w1_q,   # [784, HID_PAD]       int8
        "s1": s1,     # [1, HID_PAD]         f32
        "b1": b1,     # [1, HID_PAD]         f32
        "wh": wh_q,   # [HID_PAD, HEAD_PAD]  int8
        "sh": sh,     # [1, HEAD_PAD]        f32
        "bh": bh,     # [1, HEAD_PAD]        f32
    }


@functools.partial(jax.jit, static_argnames=("z_dim", "block_rows"))
def encoder_forward(x, packed, z_dim=Z_DIM, block_rows=128):
    """x: [B, 784] float32. packed: output of pack_params. Returns (mean, std)."""
    B, in_dim = x.shape
    hid_pad = packed["w1"].shape[1]
    head_pad = packed["bh"].shape[1]

    weight_args = (packed["w1"], packed["s1"], packed["b1"],
                   packed["wh"], packed["sh"], packed["bh"])
    # Constant block index on every grid step -> weights DMA'd once, stay resident.
    weight_specs = [pl.BlockSpec(w.shape, lambda *_: (0, 0)) for w in weight_args]

    weight_bytes = sum(int(w.size) * w.dtype.itemsize for w in weight_args)
    cost = pl.CostEstimate(
        flops=2 * B * (in_dim * hid_pad + hid_pad * head_pad),
        transcendentals=0,
        bytes_accessed=weight_bytes + int(x.size) * 4 + B * head_pad * 4,
    )

    if B <= block_rows:
        # One-shot tiny batch: single fused pass, everything resident, no grid.
        out = pl.pallas_call(
            encoder_kernel,
            out_shape=jax.ShapeDtypeStruct((B, head_pad), jnp.float32),
            grid=(),
            in_specs=[pl.BlockSpec((B, in_dim), lambda *_: (0, 0))] + weight_specs,
            out_specs=pl.BlockSpec((B, head_pad), lambda *_: (0, 0)),
            compiler_params=pltpu.CompilerParams(vmem_limit_bytes=8 << 20),
            cost_estimate=cost,
        )(x, *weight_args)
    else:
        # Batched path: stream row blocks, keep weights resident, shard blocks
        # across TensorCores on v7x via "parallel" semantics.
        nb = (B + block_rows - 1) // block_rows
        b_pad = nb * block_rows
        x_p = jnp.pad(x, ((0, b_pad - B), (0, 0))) if b_pad != B else x
        out = pl.pallas_call(
            encoder_kernel,
            out_shape=jax.ShapeDtypeStruct((b_pad, head_pad), jnp.float32),
            grid=(nb,),
            in_specs=[pl.BlockSpec((block_rows, in_dim), lambda i: (i, 0))]
                     + weight_specs,
            out_specs=pl.BlockSpec((block_rows, head_pad), lambda i: (i, 0)),
            compiler_params=pltpu.CompilerParams(
                dimension_semantics=("parallel",),
                vmem_limit_bytes=8 << 20),
            cost_estimate=cost,
        )(x_p, *weight_args)
        out = out[:B]

    mean = out[:, :z_dim]
    std = out[:, z_dim:2 * z_dim]
    return mean, std


def init_params(key, input_dim=INPUT_DIM, hidden_dim=HIDDEN_DIM, z_dim=Z_DIM):
    """Deterministic init mimicking nn.Linear (uniform +/- 1/sqrt(fan_in)).
    Weights stored transposed: [in, out]."""
    ks = jax.random.split(key, 6)

    def linear(kw, kb, fan_in, fan_out):
        bound = 1.0 / jnp.sqrt(jnp.float32(fan_in))
        w = jax.random.uniform(kw, (fan_in, fan_out), jnp.float32, -bound, bound)
        b = jax.random.uniform(kb, (1, fan_out), jnp.float32, -bound, bound)
        return w, b

    w1, b1 = linear(ks[0], ks[1], input_dim, hidden_dim)
    wm, bm = linear(ks[2], ks[3], hidden_dim, z_dim)
    ws, bs = linear(ks[4], ks[5], hidden_dim, z_dim)
    return {"w1": w1, "b1": b1, "wm": wm, "bm": bm, "ws": ws, "bs": bs}


def encoder_reference(x, params):
    h = jnp.maximum(x @ params["w1"] + params["b1"], 0.0)
    return (h @ params["wm"] + params["bm"],
            h @ params["ws"] + params["bs"])


if __name__ == "__main__":
    key = jax.random.PRNGKey(0)
    k_params, k_x1, k_x2 = jax.random.split(key, 3)

    params = init_params(k_params, INPUT_DIM, HIDDEN_DIM, Z_DIM)
    packed = pack_params(params)

    # ---- small one-shot batch (grid=() path) ----
    B_small = 8
    x_small = jax.random.uniform(k_x1, (B_small, INPUT_DIM), jnp.float32)
    mean, std = encoder_forward(x_small, packed)
    jax.block_until_ready((mean, std))

    mean_ref, std_ref = encoder_reference(x_small, params)
    assert mean.shape == (B_small, Z_DIM) and std.shape == (B_small, Z_DIM)
    # Tolerance accounts for bf16 activations + int8 per-channel weights.
    assert jnp.allclose(mean, mean_ref, atol=5e-2, rtol=5e-2), (
        float(jnp.max(jnp.abs(mean - mean_ref))))
    assert jnp.allclose(std, std_ref, atol=5e-2, rtol=5e-2), (
        float(jnp.max(jnp.abs(std - std_ref))))

    # ---- batched path (row-block grid, weights resident, "parallel" axis) ----
    B_big = 256
    x_big = jax.random.uniform(k_x2, (B_big, INPUT_DIM), jnp.float32)
    mean_b, std_b = encoder_forward(x_big, packed)
    jax.block_until_ready((mean_b, std_b))

    mean_bref, std_bref = encoder_reference(x_big, params)
    assert mean_b.shape == (B_big, Z_DIM) and std_b.shape == (B_big, Z_DIM)
    assert jnp.allclose(mean_b, mean_bref, atol=5e-2, rtol=5e-2), (
        float(jnp.max(jnp.abs(mean_b - mean_bref))))
    assert jnp.allclose(std_b, std_bref, atol=5e-2, rtol=5e-2), (
        float(jnp.max(jnp.abs(std_b - std_bref))))

    print("KERNEL_OK")
</pallas_src>

<mosaic_0001>
module attributes {stable_mosaic.version = 11 : i64} {
  func.func @encoder_kernel(%arg0: memref<8x784xf32, #tpu.memory_space<vmem>>, %arg1: memref<784x512xi8, #tpu.memory_space<vmem>>, %arg2: memref<1x512xf32, #tpu.memory_space<vmem>>, %arg3: memref<1x512xf32, #tpu.memory_space<vmem>>, %arg4: memref<512x128xi8, #tpu.memory_space<vmem>>, %arg5: memref<1x128xf32, #tpu.memory_space<vmem>>, %arg6: memref<1x128xf32, #tpu.memory_space<vmem>>, %arg7: memref<8x128xf32, #tpu.memory_space<vmem>>) attributes {dimension_semantics = [], scalar_prefetch = 0 : i64, scratch_operands = 0 : i64, tpu.core_type = #tpu.core_type<tc>} {
    %c0 = arith.constant 0 : index
    %c0_0 = arith.constant 0 : index
    %0 = vector.load %arg0[%c0, %c0_0] : memref<8x784xf32, #tpu.memory_space<vmem>>, vector<8x784xf32>
    %1 = arith.truncf %0 : vector<8x784xf32> to vector<8x784xbf16>
    %c0_1 = arith.constant 0 : index
    %c0_2 = arith.constant 0 : index
    %2 = vector.load %arg1[%c0_1, %c0_2] : memref<784x512xi8, #tpu.memory_space<vmem>>, vector<784x512xi8>
    %3 = arith.sitofp %2 : vector<784x512xi8> to vector<784x512xf32>
    %4 = arith.truncf %3 : vector<784x512xf32> to vector<784x512xbf16>
    %cst = arith.constant dense<0.000000e+00> : vector<8x512xf32>
    %5 = tpu.matmul %1, %4, %cst {dimension_numbers = #tpu.dot_dimension_numbers<[1], [0], [0], [1], [0, 0, 1, 1], [], []>} : vector<8x784xbf16>, vector<784x512xbf16>, vector<8x512xf32> -> vector<8x512xf32>
    %c0_3 = arith.constant 0 : index
    %c0_4 = arith.constant 0 : index
    %6 = vector.load %arg2[%c0_3, %c0_4] : memref<1x512xf32, #tpu.memory_space<vmem>>, vector<1x512xf32>
    %7 = vector.broadcast %6 : vector<1x512xf32> to vector<8x512xf32>
    %8 = arith.mulf %5, %7 : vector<8x512xf32>
    %c0_5 = arith.constant 0 : index
    %c0_6 = arith.constant 0 : index
    %9 = vector.load %arg3[%c0_5, %c0_6] : memref<1x512xf32, #tpu.memory_space<vmem>>, vector<1x512xf32>
    %10 = vector.broadcast %9 : vector<1x512xf32> to vector<8x512xf32>
    %11 = arith.addf %8, %10 : vector<8x512xf32>
    %cst_7 = arith.constant 0.000000e+00 : f32
    %12 = vector.broadcast %cst_7 : f32 to vector<8x512xf32>
    %13 = arith.maximumf %11, %12 : vector<8x512xf32>
    %c0_8 = arith.constant 0 : index
    %c0_9 = arith.constant 0 : index
    %14 = vector.load %arg4[%c0_8, %c0_9] : memref<512x128xi8, #tpu.memory_space<vmem>>, vector<512x128xi8>
    %15 = arith.sitofp %14 : vector<512x128xi8> to vector<512x128xf32>
    %16 = arith.truncf %15 : vector<512x128xf32> to vector<512x128xbf16>
    %17 = arith.truncf %13 : vector<8x512xf32> to vector<8x512xbf16>
    %cst_10 = arith.constant dense<0.000000e+00> : vector<8x128xf32>
    %18 = tpu.matmul %17, %16, %cst_10 {dimension_numbers = #tpu.dot_dimension_numbers<[1], [0], [0], [1], [0, 0, 1, 1], [], []>} : vector<8x512xbf16>, vector<512x128xbf16>, vector<8x128xf32> -> vector<8x128xf32>
    %c0_11 = arith.constant 0 : index
    %c0_12 = arith.constant 0 : index
    %19 = vector.load %arg5[%c0_11, %c0_12] : memref<1x128xf32, #tpu.memory_space<vmem>>, vector<1x128xf32>
    %20 = vector.broadcast %19 : vector<1x128xf32> to vector<8x128xf32>
    %21 = arith.mulf %18, %20 : vector<8x128xf32>
    %c0_13 = arith.constant 0 : index
    %c0_14 = arith.constant 0 : index
    %22 = vector.load %arg6[%c0_13, %c0_14] : memref<1x128xf32, #tpu.memory_space<vmem>>, vector<1x128xf32>
    %23 = vector.broadcast %22 : vector<1x128xf32> to vector<8x128xf32>
    %24 = arith.addf %21, %23 : vector<8x128xf32>
    %c0_15 = arith.constant 0 : index
    %c0_16 = arith.constant 0 : index
    %25 = vector.load %arg7[%c0_15, %c0_16] : memref<8x128xf32, #tpu.memory_space<vmem>>, vector<8x128xf32>
    tpu.vector_store %arg7[%c0_15, %c0_16], %24 {strides = array<i32>} : memref<8x128xf32, #tpu.memory_space<vmem>>, vector<8x128xf32>,
    return
  }
}

</mosaic_0001>

<llo_original>
// kernel: encoder_forward.1
$region0: #{encoder_forward.1}
  #allocation0 [shape = 'u32[]', space=smem, size = 0x4, offset = 0x4, fixed_abs, tag = 'smem constant byte address 0x4 - core index']
  #allocation1 [shape = 'u32[144,128]{1,0:T(1,128)}', space=vmem, size = 0x12000, scoped, tag = 'internal scratch']
  %s0 = inlined_call_operand.hbm [shape: f32[8,784], index: 0, kind: input, shape index: {}]
  %s1 = inlined_call_operand.hbm [shape: s8[784,512], index: 1, kind: input, shape index: {}]
  %s2 = inlined_call_operand.vmem [shape: f32[1,512], index: 2, kind: input, shape index: {}]
  %s3 = inlined_call_operand.hbm [shape: f32[1,512], index: 3, kind: input, shape index: {}]
  %s4 = inlined_call_operand.hbm [shape: s8[512,128], index: 4, kind: input, shape index: {}]
  %s5 = inlined_call_operand.vmem [shape: f32[1,128], index: 5, kind: input, shape index: {}]
  %s6 = inlined_call_operand.vmem [shape: f32[1,128], index: 6, kind: input, shape index: {}]
  %s7 = inlined_call_operand.vmem [shape: f32[8,128], index: 7, kind: output, shape index: {}]
  %s8 = sld [smem:[#allocation0]]
  $region54: #{encoder_forward.1} parent=0
    _
  %s10 = ssub.s32 1, %s8
  %s11 = scalar_select 0, %s10, %s8
  $region1: #{encoder_forward.1} parent=0
    #allocation2 [shape = 'u8[28672]{0}', space=vmem, size = 0x7000, scoped, tag = 'input window, operand 0, single buffered']
    #allocation3 [shape = 's32[1]{0}', space=sflag, size = 0x4, scoped, tag = 'scoped memory for encoder_forward.1']
    #allocation4 [shape = 'u8[401408]{0}', space=vmem, size = 0x62000, scoped, tag = 'input window, operand 1, single buffered']
    #allocation5 [shape = 's32[1]{0}', space=sflag, size = 0x4, scoped, tag = 'scoped memory for encoder_forward.1']
    #allocation6 [shape = 'u8[2048]{0}', space=vmem, size = 0x800, scoped, tag = 'input window, operand 3, single buffered']
    #allocation7 [shape = 'u8[65536]{0}', space=vmem, size = 0x10000, scoped, tag = 'input window, operand 4, single buffered']
    #allocation8 [shape = 's32[1]{0}', space=sflag, size = 0x4, scoped, tag = 'scoped memory for encoder_forward.1']
    %12 = vsyncpa [#allocation3], 0
    %13 = vsyncpa [#allocation5], 0
    %14 = vsyncpa [#allocation8], 0
    // Predicated region
    $region2: #{encoder_forward.1} parent=1 // pred_check
      _
    $region3: #{encoder_forward.1} parent=1 // pred_check_branch
      %16 = sbr.rel (0) target = $region5
    $region4: #{encoder_forward.1} parent=1 // pred_region
      %s18 = ssub.s32 896, 896
      %19 = vsyncadd [#allocation3], %s18
      %s21 = sshll.u32 [#allocation2], 4
      %s22 = int_to_ptr.vmem [resolvable:$true] %s21
      %24 = dma.hbm_to_vmem [thread:$0]  %s0, 896, %s22, [#allocation3]
    $region5: #{encoder_forward.1} parent=1 // pred_fallthru
      _
    // Predicated region
    $region6: #{encoder_forward.1} parent=1 // pred_check
      _
    $region7: #{encoder_forward.1} parent=1 // pred_check_branch
      %26 = sbr.rel (0) target = $region9
    $region8: #{encoder_forward.1} parent=1 // pred_region
      %s28 = ssub.s32 12544, 12544
      %29 = vsyncadd [#allocation5], %s28
      %s30 = sshll.u32 [#allocation4], 4
      %s31 = int_to_ptr.vmem [resolvable:$true] %s30
      %36 = dma.hbm_to_vmem [thread:$0]  %s1, 12544, %s31, [#allocation5], 128, 128, 8
    $region9: #{encoder_forward.1} parent=1 // pred_fallthru
      _
    // Predicated region
    $region10: #{encoder_forward.1} parent=1 // pred_check
      _
    $region11: #{encoder_forward.1} parent=1 // pred_check_branch
      %38 = sbr.rel (0) target = $region13
    $region12: #{encoder_forward.1} parent=1 // pred_region
      _
    $region13: #{encoder_forward.1} parent=1 // pred_fallthru
      _
    // Predicated region
    $region14: #{encoder_forward.1} parent=1 // pred_check
      _
    $region15: #{encoder_forward.1} parent=1 // pred_check_branch
      %40 = sbr.rel (0) target = $region17
    $region16: #{encoder_forward.1} parent=1 // pred_region
      %s42 = ssub.s32 64, 64
      %43 = vsyncadd [#allocation5], %s42
      %s45 = sshll.u32 [#allocation6], 4
      %s46 = int_to_ptr.vmem [resolvable:$true] %s45
      %48 = dma.hbm_to_vmem [thread:$0]  %s3, 64, %s46, [#allocation5]
    $region17: #{encoder_forward.1} parent=1 // pred_fallthru
      _
    // Predicated region
    $region18: #{encoder_forward.1} parent=1 // pred_check
      _
    $region19: #{encoder_forward.1} parent=1 // pred_check_branch
      %50 = sbr.rel (0) target = $region21
    $region20: #{encoder_forward.1} parent=1 // pred_region
      %s52 = ssub.s32 2048, 2048
      %53 = vsyncadd [#allocation8], %s52
      %s54 = sshll.u32 [#allocation7], 4
      %s55 = int_to_ptr.vmem [resolvable:$true] %s54
      %60 = dma.hbm_to_vmem [thread:$0]  %s4, 2048, %s55, [#allocation8], 128, 128, 8
    $region21: #{encoder_forward.1} parent=1 // pred_fallthru
      _
    // Predicated region
    $region22: #{encoder_forward.1} parent=1 // pred_check
      _
    $region23: #{encoder_forward.1} parent=1 // pred_check_branch
      %62 = sbr.rel (0) target = $region25
    $region24: #{encoder_forward.1} parent=1 // pred_region
      _
    $region25: #{encoder_forward.1} parent=1 // pred_fallthru
      _
    // Predicated region
    $region26: #{encoder_forward.1} parent=1 // pred_check
      _
    $region27: #{encoder_forward.1} parent=1 // pred_check_branch
      %64 = sbr.rel (0) target = $region29
    $region28: #{encoder_forward.1} parent=1 // pred_region
      _
    $region29: #{encoder_forward.1} parent=1 // pred_fallthru
      _
    // Predicated region
    $region30: #{encoder_forward.1} parent=1 // pred_check
      _
    $region31: #{encoder_forward.1} parent=1 // pred_check_branch
      %66 = sbr.rel (0) target = $region33
    $region32: #{encoder_forward.1} parent=1 // pred_region
      %67 = dma.done [#allocation3], 896
    $region33: #{encoder_forward.1} parent=1 // pred_fallthru
      _
    // Predicated region
    $region34: #{encoder_forward.1} parent=1 // pred_check
      _
    $region35: #{encoder_forward.1} parent=1 // pred_check_branch
      %69 = sbr.rel (0) target = $region37
    $region36: #{encoder_forward.1} parent=1 // pred_region
      %70 = dma.done [#allocation5], 12544
    $region37: #{encoder_forward.1} parent=1 // pred_fallthru
      _
    // Predicated region
    $region38: #{encoder_forward.1} parent=1 // pred_check
      _
    $region39: #{encoder_forward.1} parent=1 // pred_check_branch
      %72 = sbr.rel (0) target = $region41
    $region40: #{encoder_forward.1} parent=1 // pred_region
      %73 = dma.done [#allocation5], 64
    $region41: #{encoder_forward.1} parent=1 // pred_fallthru
      _
    // Predicated region
    $region42: #{encoder_forward.1} parent=1 // pred_check
      _
    $region43: #{encoder_forward.1} parent=1 // pred_check_branch
      %75 = sbr.rel (0) target = $region45
    $region44: #{encoder_forward.1} parent=1 // pred_region
      %76 = dma.done [#allocation8], 2048
    $region45: #{encoder_forward.1} parent=1 // pred_fallthru
      _
    %v78 = vld [vmem:[#allocation2] sm:$0xff]
    %v79 = vld [vmem:[#allocation2 + $0x8] sm:$0xff]
    %v80 = vld [vmem:[#allocation2 + $0x10] sm:$0xff]
    %v81 = vld [vmem:[#allocation2 + $0x18] sm:$0xff]
    %v82 = vld [vmem:[#allocation2 + $0x20] sm:$0xff]
    %v83 = vld [vmem:[#allocation2 + $0x28] sm:$0xff]
    %v84 = vld [vmem:[#allocation2 + $0x30] sm:$0xff]
    %v85 = vpack.c.bf16 %v78, %v78
    %v86 = vpack.c.bf16 %v79, %v79
    %v87 = vpack.c.bf16 %v80, %v80
    %v88 = vpack.c.bf16 %v81, %v81
    %v89 = vpack.c.bf16 %v82, %v82
    %v90 = vpack.c.bf16 %v83, %v83
    %v91 = vpack.c.bf16 %v84, %v84
    %v92 = vld [vmem:[#allocation4] sm:$0xff]
    %v93 = vld [vmem:[#allocation4 + $0x8] sm:$0xff]
    %v94 = vld [vmem:[#allocation4 + $0x10] sm:$0xff]
    %v95 = vld [vmem:[#allocation4 + $0x18] sm:$0xff]
    %v96 = vld [vmem:[#allocation4 + $0x20] sm:$0xff]
    %v97 = vld [vmem:[#allocation4 + $0x28] sm:$0xff]
    %v98 = vld [vmem:[#allocation4 + $0x30] sm:$0xff]
    %v99 = vld [vmem:[#allocation4 + $0x38] sm:$0xff]
    %v100 = vld [vmem:[#allocation4 + $0x40] sm:$0xff]
    %v101 = vld [vmem:[#allocation4 + $0x48] sm:$0xff]
    %v102 = vld [vmem:[#allocation4 + $0x50] sm:$0xff]
    %v103 = vld [vmem:[#allocation4 + $0x58] sm:$0xff]
    %v104 = vld [vmem:[#allocation4 + $0x60] sm:$0xff]
    %v105 = vld [vmem:[#allocation4 + $0x68] sm:$0xff]
    %v106 = vld [vmem:[#allocation4 + $0x70] sm:$0xff]
    %v107 = vld [vmem:[#allocation4 + $0x78] sm:$0xff]
    %v108 = vld [vmem:[#allocation4 + $0x80] sm:$0xff]
    %v109 = vld [vmem:[#allocation4 + $0x88] sm:$0xff]
    %v110 = vld [vmem:[#allocation4 + $0x90] sm:$0xff]
    %v111 = vld [vmem:[#allocation4 + $0x98] sm:$0xff]
    %v112 = vld [vmem:[#allocation4 + $0xa0] sm:$0xff]
    %v113 = vld [vmem:[#allocation4 + $0xa8] sm:$0xff]
    %v114 = vld [vmem:[#allocation4 + $0xb0] sm:$0xff]
    %v115 = vld [vmem:[#allocation4 + $0xb8] sm:$0xff]
    %v116 = vld [vmem:[#allocation4 + $0xc0] sm:$0xff]
    %v117 = vld [vmem:[#allocation4 + $0xc8] sm:$0xff]
    %v118 = vld [vmem:[#allocation4 + $0xd0] sm:$0xff]
    %v119 = vld [vmem:[#allocation4 + $0xd8] sm:$0xff]
    %v120 = vld [vmem:[#allocation4 + $0xe0] sm:$0xff]
    %v121 = vld [vmem:[#allocation4 + $0xe8] sm:$0xff]
    %v122 = vld [vmem:[#allocation4 + $0xf0] sm:$0xff]
    %v123 = vld [vmem:[#allocation4 + $0xf8] sm:$0xff]
    %v124 = vld [vmem:[#allocation4 + $0x100] sm:$0xff]
    %v125 = vld [vmem:[#allocation4 + $0x108] sm:$0xff]
    %v126 = vld [vmem:[#allocation4 + $0x110] sm:$0xff]
    %v127 = vld [vmem:[#allocation4 + $0x118] sm:$0xff]
    %v128 = vld [vmem:[#allocation4 + $0x120] sm:$0xff]
    %v129 = vld [vmem:[#allocation4 + $0x128] sm:$0xff]
    %v130 = vld [vmem:[#allocation4 + $0x130] sm:$0xff]
    %v131 = vld [vmem:[#allocation4 + $0x138] sm:$0xff]
    %v132 = vld [vmem:[#allocation4 + $0x140] sm:$0xff]
    %v133 = vld [vmem:[#allocation4 + $0x148] sm:$0xff]
    %v134 = vld [vmem:[#allocation4 + $0x150] sm:$0xff]
    %v135 = vld [vmem:[#allocation4 + $0x158] sm:$0xff]
    %v136 = vld [vmem:[#allocation4 + $0x160] sm:$0xff]
    %v137 = vld [vmem:[#allocation4 + $0x168] sm:$0xff]
    %v138 = vld [vmem:[#allocation4 + $0x170] sm:$0xff]
    %v139 = vld [vmem:[#allocation4 + $0x178] sm:$0xff]
    %v140 = vld [vmem:[#allocation4 + $0x180] sm:$0xff]
    %v141 = vld [vmem:[#allocation4 + $0x188] sm:$0xff]
    %v142 = vld [vmem:[#allocation4 + $0x190] sm:$0xff]
    %v143 = vld [vmem:[#allocation4 + $0x198] sm:$0xff]
    %v144 = vld [vmem:[#allocation4 + $0x1a0] sm:$0xff]
    %v145 = vld [vmem:[#allocation4 + $0x1a8] sm:$0xff]
    %v146 = vld [vmem:[#allocation4 + $0x1b0] sm:$0xff]
    %v147 = vld [vmem:[#allocation4 + $0x1b8] sm:$0xff]
    %v148 = vld [vmem:[#allocation4 + $0x1c0] sm:$0xff]
    %v149 = vld [vmem:[#allocation4 + $0x1c8] sm:$0xff]
    %v150 = vld [vmem:[#allocation4 + $0x1d0] sm:$0xff]
    %v151 = vld [vmem:[#allocation4 + $0x1d8] sm:$0xff]
    %v152 = vld [vmem:[#allocation4 + $0x1e0] sm:$0xff]
    %v153 = vld [vmem:[#allocation4 + $0x1e8] sm:$0xff]
    %v154 = vld [vmem:[#allocation4 + $0x1f0] sm:$0xff]
    %v155 = vld [vmem:[#allocation4 + $0x1f8] sm:$0xff]
    %v156 = vld [vmem:[#allocation4 + $0x200] sm:$0xff]
    %v157 = vld [vmem:[#allocation4 + $0x208] sm:$0xff]
    %v158 = vld [vmem:[#allocation4 + $0x210] sm:$0xff]
    %v159 = vld [vmem:[#allocation4 + $0x218] sm:$0xff]
    %v160 = vld [vmem:[#allocation4 + $0x220] sm:$0xff]
    %v161 = vld [vmem:[#allocation4 + $0x228] sm:$0xff]
    %v162 = vld [vmem:[#allocation4 + $0x230] sm:$0xff]
    %v163 = vld [vmem:[#allocation4 + $0x238] sm:$0xff]
    %v164 = vld [vmem:[#allocation4 + $0x240] sm:$0xff]
    %v165 = vld [vmem:[#allocation4 + $0x248] sm:$0xff]
    %v166 = vld [vmem:[#allocation4 + $0x250] sm:$0xff]
    %v167 = vld [vmem:[#allocation4 + $0x258] sm:$0xff]
    %v168 = vld [vmem:[#allocation4 + $0x260] sm:$0xff]
    %v169 = vld [vmem:[#allocation4 + $0x268] sm:$0xff]
    %v170 = vld [vmem:[#allocation4 + $0x270] sm:$0xff]
    %v171 = vld [vmem:[#allocation4 + $0x278] sm:$0xff]
    %v172 = vld [vmem:[#allocation4 + $0x280] sm:$0xff]
    %v173 = vld [vmem:[#allocation4 + $0x288] sm:$0xff]
    %v174 = vld [vmem:[#allocation4 + $0x290] sm:$0xff]
    %v175 = vld [vmem:[#allocation4 + $0x298] sm:$0xff]
    %v176 = vld [vmem:[#allocation4 + $0x2a0] sm:$0xff]
    %v177 = vld [vmem:[#allocation4 + $0x2a8] sm:$0xff]
    %v178 = vld [vmem:[#allocation4 + $0x2b0] sm:$0xff]
    %v179 = vld [vmem:[#allocation4 + $0x2b8] sm:$0xff]
    %v180 = vld [vmem:[#allocation4 + $0x2c0] sm:$0xff]
    %v181 = vld [vmem:[#allocation4 + $0x2c8] sm:$0xff]
    %v182 = vld [vmem:[#allocation4 + $0x2d0] sm:$0xff]
    %v183 = vld [vmem:[#allocation4 + $0x2d8] sm:$0xff]
    %v184 = vld [vmem:[#allocation4 + $0x2e0] sm:$0xff]
    %v185 = vld [vmem:[#allocation4 + $0x2e8] sm:$0xff]
    %v186 = vld [vmem:[#allocation4 + $0x2f0] sm:$0xff]
    %v187 = vld [vmem:[#allocation4 + $0x2f8] sm:$0xff]
    %v188 = vld [vmem:[#allocation4 + $0x300] sm:$0xff]
    %v189 = vld [vmem:[#allocation4 + $0x308] sm:$0xff]
    %v190 = vunpack.c.l.s8.bf16 %v92
    %v191 = vunpack.c.h.s8.bf16 %v92
    %v192 = vunpack.c.l.s8.bf16 %v93
    %v193 = vunpack.c.h.s8.bf16 %v93
    %v194 = vunpack.c.l.s8.bf16 %v94
    %v195 = vunpack.c.h.s8.bf16 %v94
    %v196 = vunpack.c.l.s8.bf16 %v95
    %v197 = vunpack.c.h.s8.bf16 %v95
    %v198 = vunpack.c.l.s8.bf16 %v96
    %v199 = vunpack.c.h.s8.bf16 %v96
    %v200 = vunpack.c.l.s8.bf16 %v97
    %v201 = vunpack.c.h.s8.bf16 %v97
    %v202 = vunpack.c.l.s8.bf16 %v98
    %v203 = vunpack.c.h.s8.bf16 %v98
    %v204 = vunpack.c.l.s8.bf16 %v99
    %v205 = vunpack.c.h.s8.bf16 %v99
    %v206 = vunpack.c.l.s8.bf16 %v100
    %v207 = vunpack.c.h.s8.bf16 %v100
    %v208 = vunpack.c.l.s8.bf16 %v101
    %v209 = vunpack.c.h.s8.bf16 %v101
    %v210 = vunpack.c.l.s8.bf16 %v102
    %v211 = vunpack.c.h.s8.bf16 %v102
    %v212 = vunpack.c.l.s8.bf16 %v103
    %v213 = vunpack.c.h.s8.bf16 %v103
    %v214 = vunpack.c.l.s8.bf16 %v104
    %v215 = vunpack.c.h.s8.bf16 %v104
    %v216 = vunpack.c.l.s8.bf16 %v105
    %v217 = vunpack.c.h.s8.bf16 %v105
    %v218 = vunpack.c.l.s8.bf16 %v106
    %v219 = vunpack.c.h.s8.bf16 %v106
    %v220 = vunpack.c.l.s8.bf16 %v107
    %v221 = vunpack.c.h.s8.bf16 %v107
    %v222 = vunpack.c.l.s8.bf16 %v108
    %v223 = vunpack.c.h.s8.bf16 %v108
    %v224 = vunpack.c.l.s8.bf16 %v109
    %v225 = vunpack.c.h.s8.bf16 %v109
    %v226 = vunpack.c.l.s8.bf16 %v110
    %v227 = vunpack.c.h.s8.bf16 %v110
    %v228 = vunpack.c.l.s8.bf16 %v111
    %v229 = vunpack.c.h.s8.bf16 %v111
    %v230 = vunpack.c.l.s8.bf16 %v112
    %v231 = vunpack.c.h.s8.bf16 %v112
    %v232 = vunpack.c.l.s8.bf16 %v113
    %v233 = vunpack.c.h.s8.bf16 %v113
    %v234 = vunpack.c.l.s8.bf16 %v114
    %v235 = vunpack.c.h.s8.bf16 %v114
    %v236 = vunpack.c.l.s8.bf16 %v115
    %v237 = vunpack.c.h.s8.bf16 %v115
    %v238 = vunpack.c.l.s8.bf16 %v116
    %v239 = vunpack.c.h.s8.bf16 %v116
    %v240 = vunpack.c.l.s8.bf16 %v117
    %v241 = vunpack.c.h.s8.bf16 %v117
    %v242 = vunpack.c.l.s8.bf16 %v118
    %v243 = vunpack.c.h.s8.bf16 %v118
    %v244 = vunpack.c.l.s8.bf16 %v119
    %v245 = vunpack.c.h.s8.bf16 %v119
    %v246 = vunpack.c.l.s8.bf16 %v120
    %v247 = vunpack.c.h.s8.bf16 %v120
    %v248 = vunpack.c.l.s8.bf16 %v121
    %v249 = vunpack.c.h.s8.bf16 %v121
    %v250 = vunpack.c.l.s8.bf16 %v122
    %v251 = vunpack.c.h.s8.bf16 %v122
    %v252 = vunpack.c.l.s8.bf16 %v123
    %v253 = vunpack.c.h.s8.bf16 %v123
    %v254 = vunpack.c.l.s8.bf16 %v124
    %v255 = vunpack.c.h.s8.bf16 %v124
    %v256 = vunpack.c.l.s8.bf16 %v125
    %v257 = vunpack.c.h.s8.bf16 %v125
    %v258 = vunpack.c.l.s8.bf16 %v126
    %v259 = vunpack.c.h.s8.bf16 %v126
    %v260 = vunpack.c.l.s8.bf16 %v127
    %v261 = vunpack.c.h.s8.bf16 %v127
    %v262 = vunpack.c.l.s8.bf16 %v128
    %v263 = vunpack.c.h.s8.bf16 %v128
    %v264 = vunpack.c.l.s8.bf16 %v129
    %v265 = vunpack.c.h.s8.bf16 %v129
    %v266 = vunpack.c.l.s8.bf16 %v130
    %v267 = vunpack.c.h.s8.bf16 %v130
    %v268 = vunpack.c.l.s8.bf16 %v131
    %v269 = vunpack.c.h.s8.bf16 %v131
    %v270 = vunpack.c.l.s8.bf16 %v132
    %v271 = vunpack.c.h.s8.bf16 %v132
    %v272 = vunpack.c.l.s8.bf16 %v133
    %v273 = vunpack.c.h.s8.bf16 %v133
    %v274 = vunpack.c.l.s8.bf16 %v134
    %v275 = vunpack.c.h.s8.bf16 %v134
    %v276 = vunpack.c.l.s8.bf16 %v135
    %v277 = vunpack.c.h.s8.bf16 %v135
    %v278 = vunpack.c.l.s8.bf16 %v136
    %v279 = vunpack.c.h.s8.bf16 %v136
    %v280 = vunpack.c.l.s8.bf16 %v137
    %v281 = vunpack.c.h.s8.bf16 %v137
    %v282 = vunpack.c.l.s8.bf16 %v138
    %v283 = vunpack.c.h.s8.bf16 %v138
    %v284 = vunpack.c.l.s8.bf16 %v139
    %v285 = vunpack.c.h.s8.bf16 %v139
    %v286 = vunpack.c.l.s8.bf16 %v140
    %v287 = vunpack.c.h.s8.bf16 %v140
    %v288 = vunpack.c.l.s8.bf16 %v141
    %v289 = vunpack.c.h.s8.bf16 %v141
    %v290 = vunpack.c.l.s8.bf16 %v142
    %v291 = vunpack.c.h.s8.bf16 %v142
    %v292 = vunpack.c.l.s8.bf16 %v143
    %v293 = vunpack.c.h.s8.bf16 %v143
    %v294 = vunpack.c.l.s8.bf16 %v144
    %v295 = vunpack.c.h.s8.bf16 %v144
    %v296 = vunpack.c.l.s8.bf16 %v145
    %v297 = vunpack.c.h.s8.bf16 %v145
    %v298 = vunpack.c.l.s8.bf16 %v146
    %v299 = vunpack.c.h.s8.bf16 %v146
    %v300 = vunpack.c.l.s8.bf16 %v147
    %v301 = vunpack.c.h.s8.bf16 %v147
    %v302 = vunpack.c.l.s8.bf16 %v148
    %v303 = vunpack.c.h.s8.bf16 %v148
    %v304 = vunpack.c.l.s8.bf16 %v149
    %v305 = vunpack.c.h.s8.bf16 %v149
    %v306 = vunpack.c.l.s8.bf16 %v150
    %v307 = vunpack.c.h.s8.bf16 %v150
    %v308 = vunpack.c.l.s8.bf16 %v151
    %v309 = vunpack.c.h.s8.bf16 %v151
    %v310 = vunpack.c.l.s8.bf16 %v152
    %v311 = vunpack.c.h.s8.bf16 %v152
    %v312 = vunpack.c.l.s8.bf16 %v153
    %v313 = vunpack.c.h.s8.bf16 %v153
    %v314 = vunpack.c.l.s8.bf16 %v154
    %v315 = vunpack.c.h.s8.bf16 %v154
    %v316 = vunpack.c.l.s8.bf16 %v155
    %v317 = vunpack.c.h.s8.bf16 %v155
    %v318 = vunpack.c.l.s8.bf16 %v156
    %v319 = vunpack.c.h.s8.bf16 %v156
    %v320 = vunpack.c.l.s8.bf16 %v157
    %v321 = vunpack.c.h.s8.bf16 %v157
    %v322 = vunpack.c.l.s8.bf16 %v158
    %v323 = vunpack.c.h.s8.bf16 %v158
    %v324 = vunpack.c.l.s8.bf16 %v159
    %v325 = vunpack.c.h.s8.bf16 %v159
    %v326 = vunpack.c.l.s8.bf16 %v160
    %v327 = vunpack.c.h.s8.bf16 %v160
    %v328 = vunpack.c.l.s8.bf16 %v161
    %v329 = vunpack.c.h.s8.bf16 %v161
    %v330 = vunpack.c.l.s8.bf16 %v162
    %v331 = vunpack.c.h.s8.bf16 %v162
    %v332 = vunpack.c.l.s8.bf16 %v163
    %v333 = vunpack.c.h.s8.bf16 %v163
    %v334 = vunpack.c.l.s8.bf16 %v164
    %v335 = vunpack.c.h.s8.bf16 %v164
    %v336 = vunpack.c.l.s8.bf16 %v165
    %v337 = vunpack.c.h.s8.bf16 %v165
    %v338 = vunpack.c.l.s8.bf16 %v166
    %v339 = vunpack.c.h.s8.bf16 %v166
    %v340 = vunpack.c.l.s8.bf16 %v167
    %v341 = vunpack.c.h.s8.bf16 %v167
    %v342 = vunpack.c.l.s8.bf16 %v168
    %v343 = vunpack.c.h.s8.bf16 %v168
    %v344 = vunpack.c.l.s8.bf16 %v169
    %v345 = vunpack.c.h.s8.bf16 %v169
    %v346 = vunpack.c.l.s8.bf16 %v170
    %v347 = vunpack.c.h.s8.bf16 %v170
    %v348 = vunpack.c.l.s8.bf16 %v171
    %v349 = vunpack.c.h.s8.bf16 %v171
    %v350 = vunpack.c.l.s8.bf16 %v172
    %v351 = vunpack.c.h.s8.bf16 %v172
    %v352 = vunpack.c.l.s8.bf16 %v173
    %v353 = vunpack.c.h.s8.bf16 %v173
    %v354 = vunpack.c.l.s8.bf16 %v174
    %v355 = vunpack.c.h.s8.bf16 %v174
    %v356 = vunpack.c.l.s8.bf16 %v175
    %v357 = vunpack.c.h.s8.bf16 %v175
    %v358 = vunpack.c.l.s8.bf16 %v176
    %v359 = vunpack.c.h.s8.bf16 %v176
    %v360 = vunpack.c.l.s8.bf16 %v177
    %v361 = vunpack.c.h.s8.bf16 %v177
    %v362 = vunpack.c.l.s8.bf16 %v178
    %v363 = vunpack.c.h.s8.bf16 %v178
    %v364 = vunpack.c.l.s8.bf16 %v179
    %v365 = vunpack.c.h.s8.bf16 %v179
    %v366 = vunpack.c.l.s8.bf16 %v180
    %v367 = vunpack.c.h.s8.bf16 %v180
    %v368 = vunpack.c.l.s8.bf16 %v181
    %v369 = vunpack.c.h.s8.bf16 %v181
    %v370 = vunpack.c.l.s8.bf16 %v182
    %v371 = vunpack.c.h.s8.bf16 %v182
    %v372 = vunpack.c.l.s8.bf16 %v183
    %v373 = vunpack.c.h.s8.bf16 %v183
    %v374 = vunpack.c.l.s8.bf16 %v184
    %v375 = vunpack.c.h.s8.bf16 %v184
    %v376 = vunpack.c.l.s8.bf16 %v185
    %v377 = vunpack.c.h.s8.bf16 %v185
    %v378 = vunpack.c.l.s8.bf16 %v186
    %v379 = vunpack.c.h.s8.bf16 %v186
    %v380 = vunpack.c.l.s8.bf16 %v187
    %v381 = vunpack.c.h.s8.bf16 %v187
    %v382 = vunpack.c.l.s8.bf16 %v188
    %v383 = vunpack.c.h.s8.bf16 %v188
    %v384 = vunpack.c.l.s8.bf16 %v189
    %v385 = vunpack.c.h.s8.bf16 %v189
    %v582 = vunpack.c.l.b16 %v190
    %v583 = vunpack.c.h.b16 %v190
    %v584 = vunpack.c.l.b16 %v191
    %v585 = vunpack.c.h.b16 %v191
    %v586 = vunpack.c.l.b16 %v192
    %v587 = vunpack.c.h.b16 %v192
    %v588 = vunpack.c.l.b16 %v193
    %v589 = vunpack.c.h.b16 %v193
    %v590 = vunpack.c.l.b16 %v194
    %v591 = vunpack.c.h.b16 %v194
    %v592 = vunpack.c.l.b16 %v195
    %v593 = vunpack.c.h.b16 %v195
    %v594 = vunpack.c.l.b16 %v196
    %v595 = vunpack.c.h.b16 %v196
    %v596 = vunpack.c.l.b16 %v197
    %v597 = vunpack.c.h.b16 %v197
    %v598 = vunpack.c.l.b16 %v198
    %v599 = vunpack.c.h.b16 %v198
    %v600 = vunpack.c.l.b16 %v199
    %v601 = vunpack.c.h.b16 %v199
    %v602 = vunpack.c.l.b16 %v200
    %v603 = vunpack.c.h.b16 %v200
    %v604 = vunpack.c.l.b16 %v201
    %v605 = vunpack.c.h.b16 %v201
    %v606 = vunpack.c.l.b16 %v202
    %v607 = vunpack.c.h.b16 %v202
    %v608 = vunpack.c.l.b16 %v203
    %v609 = vunpack.c.h.b16 %v203
    %v610 = vunpack.c.l.b16 %v204
    %v611 = vunpack.c.h.b16 %v204
    %v612 = vunpack.c.l.b16 %v205
    %v613 = vunpack.c.h.b16 %v205
    %v614 = vunpack.c.l.b16 %v206
    %v615 = vunpack.c.h.b16 %v206
    %v616 = vunpack.c.l.b16 %v207
    %v617 = vunpack.c.h.b16 %v207
    %v618 = vunpack.c.l.b16 %v208
    %v619 = vunpack.c.h.b16 %v208
    %v620 = vunpack.c.l.b16 %v209
    %v621 = vunpack.c.h.b16 %v209
    %v622 = vunpack.c.l.b16 %v210
    %v623 = vunpack.c.h.b16 %v210
    %v624 = vunpack.c.l.b16 %v211
    %v625 = vunpack.c.h.b16 %v211
    %v626 = vunpack.c.l.b16 %v212
    %v627 = vunpack.c.h.b16 %v212
    %v628 = vunpack.c.l.b16 %v213
    %v629 = vunpack.c.h.b16 %v213
    %v630 = vunpack.c.l.b16 %v214
    %v631 = vunpack.c.h.b16 %v214
    %v632 = vunpack.c.l.b16 %v215
    %v633 = vunpack.c.h.b16 %v215
    %v634 = vunpack.c.l.b16 %v216
    %v635 = vunpack.c.h.b16 %v216
    %v636 = vunpack.c.l.b16 %v217
    %v637 = vunpack.c.h.b16 %v217
    %v638 = vunpack.c.l.b16 %v218
    %v639 = vunpack.c.h.b16 %v218
    %v640 = vunpack.c.l.b16 %v219
    %v641 = vunpack.c.h.b16 %v219
    %v642 = vunpack.c.l.b16 %v220
    %v643 = vunpack.c.h.b16 %v220
    %v644 = vunpack.c.l.b16 %v221
    %v645 = vunpack.c.h.b16 %v221
    %v646 = vunpack.c.l.b16 %v222
    %v647 = vunpack.c.h.b16 %v222
    %v648 = vunpack.c.l.b16 %v223
    %v649 = vunpack.c.h.b16 %v223
    %v650 = vunpack.c.l.b16 %v224
    %v651 = vunpack.c.h.b16 %v224
    %v652 = vunpack.c.l.b16 %v225
    %v653 = vunpack.c.h.b16 %v225
    %v654 = vunpack.c.l.b16 %v226
    %v655 = vunpack.c.h.b16 %v226
    %v656 = vunpack.c.l.b16 %v227
    %v657 = vunpack.c.h.b16 %v227
    %v658 = vunpack.c.l.b16 %v228
    %v659 = vunpack.c.h.b16 %v228
    %v660 = vunpack.c.l.b16 %v229
    %v661 = vunpack.c.h.b16 %v229
    %v662 = vunpack.c.l.b16 %v230
    %v663 = vunpack.c.h.b16 %v230
    %v664 = vunpack.c.l.b16 %v231
    %v665 = vunpack.c.h.b16 %v231
    %v666 = vunpack.c.l.b16 %v232
    %v667 = vunpack.c.h.b16 %v232
    %v668 = vunpack.c.l.b16 %v233
    %v669 = vunpack.c.h.b16 %v233
    %v670 = vunpack.c.l.b16 %v234
    %v671 = vunpack.c.h.b16 %v234
    %v672 = vunpack.c.l.b16 %v235
    %v673 = vunpack.c.h.b16 %v235
    %v674 = vunpack.c.l.b16 %v236
    %v675 = vunpack.c.h.b16 %v236
    %v676 = vunpack.c.l.b16 %v237
    %v677 = vunpack.c.h.b16 %v237
    %v678 = vunpack.c.l.b16 %v238
    %v679 = vunpack.c.h.b16 %v238
    %v680 = vunpack.c.l.b16 %v239
    %v681 = vunpack.c.h.b16 %v239
    %v682 = vunpack.c.l.b16 %v240
    %v683 = vunpack.c.h.b16 %v240
    %v684 = vunpack.c.l.b16 %v241
    %v685 = vunpack.c.h.b16 %v241
    %v686 = vunpack.c.l.b16 %v242
    %v687 = vunpack.c.h.b16 %v242
    %v688 = vunpack.c.l.b16 %v243
    %v689 = vunpack.c.h.b16 %v243
    %v690 = vunpack.c.l.b16 %v244
    %v691 = vunpack.c.h.b16 %v244
    %v692 = vunpack.c.l.b16 %v245
    %v693 = vunpack.c.h.b16 %v245
    %v694 = vunpack.c.l.b16 %v246
    %v695 = vunpack.c.h.b16 %v246
    %v696 = vunpack.c.l.b16 %v247
    %v697 = vunpack.c.h.b16 %v247
    %v698 = vunpack.c.l.b16 %v248
    %v699 = vunpack.c.h.b16 %v248
    %v700 = vunpack.c.l.b16 %v249
    %v701 = vunpack.c.h.b16 %v249
    %v702 = vunpack.c.l.b16 %v250
    %v703 = vunpack.c.h.b16 %v250
    %v704 = vunpack.c.l.b16 %v251
    %v705 = vunpack.c.h.b16 %v251
    %v706 = vunpack.c.l.b16 %v252
    %v707 = vunpack.c.h.b16 %v252
    %v708 = vunpack.c.l.b16 %v253
    %v709 = vunpack.c.h.b16 %v253
    %v710 = vunpack.c.l.b16 %v254
    %v711 = vunpack.c.h.b16 %v254
    %v712 = vunpack.c.l.b16 %v255
    %v713 = vunpack.c.h.b16 %v255
    %v714 = vunpack.c.l.b16 %v256
    %v715 = vunpack.c.h.b16 %v256
    %v716 = vunpack.c.l.b16 %v257
    %v717 = vunpack.c.h.b16 %v257
    %v718 = vunpack.c.l.b16 %v258
    %v719 = vunpack.c.h.b16 %v258
    %v720 = vunpack.c.l.b16 %v259
    %v721 = vunpack.c.h.b16 %v259
    %v722 = vunpack.c.l.b16 %v260
    %v723 = vunpack.c.h.b16 %v260
    %v724 = vunpack.c.l.b16 %v261
    %v725 = vunpack.c.h.b16 %v261
    %v726 = vunpack.c.l.b16 %v262
    %v727 = vunpack.c.h.b16 %v262
    %v728 = vunpack.c.l.b16 %v263
    %v729 = vunpack.c.h.b16 %v263
    %v730 = vunpack.c.l.b16 %v264
    %v731 = vunpack.c.h.b16 %v264
    %v732 = vunpack.c.l.b16 %v265
    %v733 = vunpack.c.h.b16 %v265
    %v734 = vunpack.c.l.b16 %v266
    %v735 = vunpack.c.h.b16 %v266
    %v736 = vunpack.c.l.b16 %v267
    %v737 = vunpack.c.h.b16 %v267
    %v738 = vunpack.c.l.b16 %v268
    %v739 = vunpack.c.h.b16 %v268
    %v740 = vunpack.c.l.b16 %v269
    %v741 = vunpack.c.h.b16 %v269
    %v742 = vunpack.c.l.b16 %v270
    %v743 = vunpack.c.h.b16 %v270
    %v744 = vunpack.c.l.b16 %v271
    %v745 = vunpack.c.h.b16 %v271
    %v746 = vunpack.c.l.b16 %v272
    %v747 = vunpack.c.h.b16 %v272
    %v748 = vunpack.c.l.b16 %v273
    %v749 = vunpack.c.h.b16 %v273
    %v750 = vunpack.c.l.b16 %v274
    %v751 = vunpack.c.h.b16 %v274
    %v752 = vunpack.c.l.b16 %v275
    %v753 = vunpack.c.h.b16 %v275
    %v754 = vunpack.c.l.b16 %v276
    %v755 = vunpack.c.h.b16 %v276
    %v756 = vunpack.c.l.b16 %v277
    %v757 = vunpack.c.h.b16 %v277
    %v758 = vunpack.c.l.b16 %v278
    %v759 = vunpack.c.h.b16 %v278
    %v760 = vunpack.c.l.b16 %v279
    %v761 = vunpack.c.h.b16 %v279
    %v762 = vunpack.c.l.b16 %v280
    %v763 = vunpack.c.h.b16 %v280
    %v764 = vunpack.c.l.b16 %v281
    %v765 = vunpack.c.h.b16 %v281
    %v766 = vunpack.c.l.b16 %v282
    %v767 = vunpack.c.h.b16 %v282
    %v768 = vunpack.c.l.b16 %v283
    %v769 = vunpack.c.h.b16 %v283
    %v770 = vunpack.c.l.b16 %v284
    %v771 = vunpack.c.h.b16 %v284
    %v772 = vunpack.c.l.b16 %v285
    %v773 = vunpack.c.h.b16 %v285
    %v774 = vunpack.c.l.b16 %v286
    %v775 = vunpack.c.h.b16 %v286
    %v776 = vunpack.c.l.b16 %v287
    %v777 = vunpack.c.h.b16 %v287
    %v778 = vunpack.c.l.b16 %v288
    %v779 = vunpack.c.h.b16 %v288
    %v780 = vunpack.c.l.b16 %v289
    %v781 = vunpack.c.h.b16 %v289
    %v782 = vunpack.c.l.b16 %v290
    %v783 = vunpack.c.h.b16 %v290
    %v784 = vunpack.c.l.b16 %v291
    %v785 = vunpack.c.h.b16 %v291
    %v786 = vunpack.c.l.b16 %v292
    %v787 = vunpack.c.h.b16 %v292
    %v788 = vunpack.c.l.b16 %v293
    %v789 = vunpack.c.h.b16 %v293
    %v790 = vunpack.c.l.b16 %v294
    %v791 = vunpack.c.h.b16 %v294
    %v792 = vunpack.c.l.b16 %v295
    %v793 = vunpack.c.h.b16 %v295
    %v794 = vunpack.c.l.b16 %v296
    %v795 = vunpack.c.h.b16 %v296
    %v796 = vunpack.c.l.b16 %v297
    %v797 = vunpack.c.h.b16 %v297
    %v798 = vunpack.c.l.b16 %v298
    %v799 = vunpack.c.h.b16 %v298
    %v800 = vunpack.c.l.b16 %v299
    %v801 = vunpack.c.h.b16 %v299
    %v802 = vunpack.c.l.b16 %v300
    %v803 = vunpack.c.h.b16 %v300
    %v804 = vunpack.c.l.b16 %v301
    %v805 = vunpack.c.h.b16 %v301
    %v806 = vunpack.c.l.b16 %v302
    %v807 = vunpack.c.h.b16 %v302
    %v808 = vunpack.c.l.b16 %v303
    %v809 = vunpack.c.h.b16 %v303
    %v810 = vunpack.c.l.b16 %v304
    %v811 = vunpack.c.h.b16 %v304
    %v812 = vunpack.c.l.b16 %v305
    %v813 = vunpack.c.h.b16 %v305
    %v814 = vunpack.c.l.b16 %v306
    %v815 = vunpack.c.h.b16 %v306
    %v816 = vunpack.c.l.b16 %v307
    %v817 = vunpack.c.h.b16 %v307
    %v818 = vunpack.c.l.b16 %v308
    %v819 = vunpack.c.h.b16 %v308
    %v820 = vunpack.c.l.b16 %v309
    %v821 = vunpack.c.h.b16 %v309
    %v822 = vunpack.c.l.b16 %v310
    %v823 = vunpack.c.h.b16 %v310
    %v824 = vunpack.c.l.b16 %v311
    %v825 = vunpack.c.h.b16 %v311
    %v826 = vunpack.c.l.b16 %v312
    %v827 = vunpack.c.h.b16 %v312
    %v828 = vunpack.c.l.b16 %v313
    %v829 = vunpack.c.h.b16 %v313
    %v830 = vunpack.c.l.b16 %v314
    %v831 = vunpack.c.h.b16 %v314
    %v832 = vunpack.c.l.b16 %v315
    %v833 = vunpack.c.h.b16 %v315
    %v834 = vunpack.c.l.b16 %v316
    %v835 = vunpack.c.h.b16 %v316
    %v836 = vunpack.c.l.b16 %v317
    %v837 = vunpack.c.h.b16 %v317
    %v838 = vunpack.c.l.b16 %v318
    %v839 = vunpack.c.h.b16 %v318
    %v840 = vunpack.c.l.b16 %v319
    %v841 = vunpack.c.h.b16 %v319
    %v842 = vunpack.c.l.b16 %v320
    %v843 = vunpack.c.h.b16 %v320
    %v844 = vunpack.c.l.b16 %v321
    %v845 = vunpack.c.h.b16 %v321
    %v846 = vunpack.c.l.b16 %v322
    %v847 = vunpack.c.h.b16 %v322
    %v848 = vunpack.c.l.b16 %v323
    %v849 = vunpack.c.h.b16 %v323
    %v850 = vunpack.c.l.b16 %v324
    %v851 = vunpack.c.h.b16 %v324
    %v852 = vunpack.c.l.b16 %v325
    %v853 = vunpack.c.h.b16 %v325
    %v854 = vunpack.c.l.b16 %v326
    %v855 = vunpack.c.h.b16 %v326
    %v856 = vunpack.c.l.b16 %v327
    %v857 = vunpack.c.h.b16 %v327
    %v858 = vunpack.c.l.b16 %v328
    %v859 = vunpack.c.h.b16 %v328
    %v860 = vunpack.c.l.b16 %v329
    %v861 = vunpack.c.h.b16 %v329
    %v862 = vunpack.c.l.b16 %v330
    %v863 = vunpack.c.h.b16 %v330
    %v864 = vunpack.c.l.b16 %v331
    %v865 = vunpack.c.h.b16 %v331
    %v866 = vunpack.c.l.b16 %v332
    %v867 = vunpack.c.h.b16 %v332
    %v868 = vunpack.c.l.b16 %v333
    %v869 = vunpack.c.h.b16 %v333
    %v870 = vunpack.c.l.b16 %v334
    %v871 = vunpack.c.h.b16 %v334
    %v872 = vunpack.c.l.b16 %v335
    %v873 = vunpack.c.h.b16 %v335
    %v874 = vunpack.c.l.b16 %v336
    %v875 = vunpack.c.h.b16 %v336
    %v876 = vunpack.c.l.b16 %v337
    %v877 = vunpack.c.h.b16 %v337
    %v878 = vunpack.c.l.b16 %v338
    %v879 = vunpack.c.h.b16 %v338
    %v880 = vunpack.c.l.b16 %v339
    %v881 = vunpack.c.h.b16 %v339
    %v882 = vunpack.c.l.b16 %v340
    %v883 = vunpack.c.h.b16 %v340
    %v884 = vunpack.c.l.b16 %v341
    %v885 = vunpack.c.h.b16 %v341
    %v886 = vunpack.c.l.b16 %v342
    %v887 = vunpack.c.h.b16 %v342
    %v888 = vunpack.c.l.b16 %v343
    %v889 = vunpack.c.h.b16 %v343
    %v890 = vunpack.c.l.b16 %v344
    %v891 = vunpack.c.h.b16 %v344
    %v892 = vunpack.c.l.b16 %v345
    %v893 = vunpack.c.h.b16 %v345
    %v894 = vunpack.c.l.b16 %v346
    %v895 = vunpack.c.h.b16 %v346
    %v896 = vunpack.c.l.b16 %v347
    %v897 = vunpack.c.h.b16 %v347
    %v898 = vunpack.c.l.b16 %v348
    %v899 = vunpack.c.h.b16 %v348
    %v900 = vunpack.c.l.b16 %v349
    %v901 = vunpack.c.h.b16 %v349
    %v902 = vunpack.c.l.b16 %v350
    %v903 = vunpack.c.h.b16 %v350
    %v904 = vunpack.c.l.b16 %v351
    %v905 = vunpack.c.h.b16 %v351
    %v906 = vunpack.c.l.b16 %v352
    %v907 = vunpack.c.h.b16 %v352
    %v908 = vunpack.c.l.b16 %v353
    %v909 = vunpack.c.h.b16 %v353
    %v910 = vunpack.c.l.b16 %v354
    %v911 = vunpack.c.h.b16 %v354
    %v912 = vunpack.c.l.b16 %v355
    %v913 = vunpack.c.h.b16 %v355
    %v914 = vunpack.c.l.b16 %v356
    %v915 = vunpack.c.h.b16 %v356
    %v916 = vunpack.c.l.b16 %v357
    %v917 = vunpack.c.h.b16 %v357
    %v918 = vunpack.c.l.b16 %v358
    %v919 = vunpack.c.h.b16 %v358
    %v920 = vunpack.c.l.b16 %v359
    %v921 = vunpack.c.h.b16 %v359
    %v922 = vunpack.c.l.b16 %v360
    %v923 = vunpack.c.h.b16 %v360
    %v924 = vunpack.c.l.b16 %v361
    %v925 = vunpack.c.h.b16 %v361
    %v926 = vunpack.c.l.b16 %v362
    %v927 = vunpack.c.h.b16 %v362
    %v928 = vunpack.c.l.b16 %v363
    %v929 = vunpack.c.h.b16 %v363
    %v930 = vunpack.c.l.b16 %v364
    %v931 = vunpack.c.h.b16 %v364
    %v932 = vunpack.c.l.b16 %v365
    %v933 = vunpack.c.h.b16 %v365
    %v934 = vunpack.c.l.b16 %v366
    %v935 = vunpack.c.h.b16 %v366
    %v936 = vunpack.c.l.b16 %v367
    %v937 = vunpack.c.h.b16 %v367
    %v938 = vunpack.c.l.b16 %v368
    %v939 = vunpack.c.h.b16 %v368
    %v940 = vunpack.c.l.b16 %v369
    %v941 = vunpack.c.h.b16 %v369
    %v942 = vunpack.c.l.b16 %v370
    %v943 = vunpack.c.h.b16 %v370
    %v944 = vunpack.c.l.b16 %v371
    %v945 = vunpack.c.h.b16 %v371
    %v946 = vunpack.c.l.b16 %v372
    %v947 = vunpack.c.h.b16 %v372
    %v948 = vunpack.c.l.b16 %v373
    %v949 = vunpack.c.h.b16 %v373
    %v950 = vunpack.c.l.b16 %v374
    %v951 = vunpack.c.h.b16 %v374
    %v952 = vunpack.c.l.b16 %v375
    %v953 = vunpack.c.h.b16 %v375
    %v954 = vunpack.c.l.b16 %v376
    %v955 = vunpack.c.h.b16 %v376
    %v956 = vunpack.c.l.b16 %v377
    %v957 = vunpack.c.h.b16 %v377
    %v958 = vunpack.c.l.b16 %v378
    %v959 = vunpack.c.h.b16 %v378
    %v960 = vunpack.c.l.b16 %v379
    %v961 = vunpack.c.h.b16 %v379
    %v962 = vunpack.c.l.b16 %v380
    %v963 = vunpack.c.h.b16 %v380
    %v964 = vunpack.c.l.b16 %v381
    %v965 = vunpack.c.h.b16 %v381
    %v966 = vunpack.c.l.b16 %v382
    %v967 = vunpack.c.h.b16 %v382
    %v968 = vunpack.c.l.b16 %v383
    %v969 = vunpack.c.h.b16 %v383
    %v970 = vunpack.c.l.b16 %v384
    %v971 = vunpack.c.h.b16 %v384
    %v972 = vunpack.c.l.b16 %v385
    %v973 = vunpack.c.h.b16 %v385
    %v974 = vpack.c.b16 %v586, %v582
    %v975 = vpack.c.b16 %v587, %v583
    %v976 = vpack.c.b16 %v588, %v584
    %v977 = vpack.c.b16 %v589, %v585
    %v978 = vpack.c.b16 %v594, %v590
    %v979 = vpack.c.b16 %v595, %v591
    %v980 = vpack.c.b16 %v596, %v592
    %v981 = vpack.c.b16 %v597, %v593
    %v982 = vpack.c.b16 %v602, %v598
    %v983 = vpack.c.b16 %v603, %v599
    %v984 = vpack.c.b16 %v604, %v600
    %v985 = vpack.c.b16 %v605, %v601
    %v986 = vpack.c.b16 %v610, %v606
    %v987 = vpack.c.b16 %v611, %v607
    %v988 = vpack.c.b16 %v612, %v608
    %v989 = vpack.c.b16 %v613, %v609
    %v990 = vpack.c.b16 %v618, %v614
    %v991 = vpack.c.b16 %v619, %v615
    %v992 = vpack.c.b16 %v620, %v616
    %v993 = vpack.c.b16 %v621, %v617
    %v994 = vpack.c.b16 %v626, %v622
    %v995 = vpack.c.b16 %v627, %v623
    %v996 = vpack.c.b16 %v628, %v624
    %v997 = vpack.c.b16 %v629, %v625
    %v998 = vpack.c.b16 %v634, %v630
    %v999 = vpack.c.b16 %v635, %v631
    %v1000 = vpack.c.b16 %v636, %v632
    %v1001 = vpack.c.b16 %v637, %v633
    %v1002 = vpack.c.b16 %v642, %v638
    %v1003 = vpack.c.b16 %v643, %v639
    %v1004 = vpack.c.b16 %v644, %v640
    %v1005 = vpack.c.b16 %v645, %v641
    %v1006 = vpack.c.b16 %v650, %v646
    %v1007 = vpack.c.b16 %v651, %v647
    %v1008 = vpack.c.b16 %v652, %v648
    %v1009 = vpack.c.b16 %v653, %v649
    %v1010 = vpack.c.b16 %v658, %v654
    %v1011 = vpack.c.b16 %v659, %v655
    %v1012 = vpack.c.b16 %v660, %v656
    %v1013 = vpack.c.b16 %v661, %v657
    %v1014 = vpack.c.b16 %v666, %v662
    %v1015 = vpack.c.b16 %v667, %v663
    %v1016 = vpack.c.b16 %v668, %v664
    %v1017 = vpack.c.b16 %v669, %v665
    %v1018 = vpack.c.b16 %v674, %v670
    %v1019 = vpack.c.b16 %v675, %v671
    %v1020 = vpack.c.b16 %v676, %v672
    %v1021 = vpack.c.b16 %v677, %v673
    %v1022 = vpack.c.b16 %v682, %v678
    %v1023 = vpack.c.b16 %v683, %v679
    %v1024 = vpack.c.b16 %v684, %v680
    %v1025 = vpack.c.b16 %v685, %v681
    %v1026 = vpack.c.b16 %v690, %v686
    %v1027 = vpack.c.b16 %v691, %v687
    %v1028 = vpack.c.b16 %v692, %v688
    %v1029 = vpack.c.b16 %v693, %v689
    %v1030 = vpack.c.b16 %v698, %v694
    %v1031 = vpack.c.b16 %v699, %v695
    %v1032 = vpack.c.b16 %v700, %v696
    %v1033 = vpack.c.b16 %v701, %v697
    %v1034 = vpack.c.b16 %v706, %v702
    %v1035 = vpack.c.b16 %v707, %v703
    %v1036 = vpack.c.b16 %v708, %v704
    %v1037 = vpack.c.b16 %v709, %v705
    %v1038 = vpack.c.b16 %v714, %v710
    %v1039 = vpack.c.b16 %v715, %v711
    %v1040 = vpack.c.b16 %v716, %v712
    %v1041 = vpack.c.b16 %v717, %v713
    %v1042 = vpack.c.b16 %v722, %v718
    %v1043 = vpack.c.b16 %v723, %v719
    %v1044 = vpack.c.b16 %v724, %v720
    %v1045 = vpack.c.b16 %v725, %v721
    %v1046 = vpack.c.b16 %v730, %v726
    %v1047 = vpack.c.b16 %v731, %v727
    %v1048 = vpack.c.b16 %v732, %v728
    %v1049 = vpack.c.b16 %v733, %v729
    %v1050 = vpack.c.b16 %v738, %v734
    %v1051 = vpack.c.b16 %v739, %v735
    %v1052 = vpack.c.b16 %v740, %v736
    %v1053 = vpack.c.b16 %v741, %v737
    %v1054 = vpack.c.b16 %v746, %v742
    %v1055 = vpack.c.b16 %v747, %v743
    %v1056 = vpack.c.b16 %v748, %v744
    %v1057 = vpack.c.b16 %v749, %v745
    %v1058 = vpack.c.b16 %v754, %v750
    %v1059 = vpack.c.b16 %v755, %v751
    %v1060 = vpack.c.b16 %v756, %v752
    %v1061 = vpack.c.b16 %v757, %v753
    %v1062 = vpack.c.b16 %v762, %v758
    %v1063 = vpack.c.b16 %v763, %v759
    %v1064 = vpack.c.b16 %v764, %v760
    %v1065 = vpack.c.b16 %v765, %v761
    %v1066 = vpack.c.b16 %v770, %v766
    %v1067 = vpack.c.b16 %v771, %v767
    %v1068 = vpack.c.b16 %v772, %v768
    %v1069 = vpack.c.b16 %v773, %v769
    %v1070 = vpack.c.b16 %v778, %v774
    %v1071 = vpack.c.b16 %v779, %v775
    %v1072 = vpack.c.b16 %v780, %v776
    %v1073 = vpack.c.b16 %v781, %v777
    %v1074 = vpack.c.b16 %v786, %v782
    %v1075 = vpack.c.b16 %v787, %v783
    %v1076 = vpack.c.b16 %v788, %v784
    %v1077 = vpack.c.b16 %v789, %v785
    %v1078 = vpack.c.b16 %v794, %v790
    %v1079 = vpack.c.b16 %v795, %v791
    %v1080 = vpack.c.b16 %v796, %v792
    %v1081 = vpack.c.b16 %v797, %v793
    %v1082 = vpack.c.b16 %v802, %v798
    %v1083 = vpack.c.b16 %v803, %v799
    %v1084 = vpack.c.b16 %v804, %v800
    %v1085 = vpack.c.b16 %v805, %v801
    %v1086 = vpack.c.b16 %v810, %v806
    %v1087 = vpack.c.b16 %v811, %v807
    %v1088 = vpack.c.b16 %v812, %v808
    %v1089 = vpack.c.b16 %v813, %v809
    %v1090 = vpack.c.b16 %v818, %v814
    %v1091 = vpack.c.b16 %v819, %v815
    %v1092 = vpack.c.b16 %v820, %v816
    %v1093 = vpack.c.b16 %v821, %v817
    %v1094 = vpack.c.b16 %v826, %v822
    %v1095 = vpack.c.b16 %v827, %v823
    %v1096 = vpack.c.b16 %v828, %v824
    %v1097 = vpack.c.b16 %v829, %v825
    %v1098 = vpack.c.b16 %v834, %v830
    %v1099 = vpack.c.b16 %v835, %v831
    %v1100 = vpack.c.b16 %v836, %v832
    %v1101 = vpack.c.b16 %v837, %v833
    %v1102 = vpack.c.b16 %v842, %v838
    %v1103 = vpack.c.b16 %v843, %v839
    %v1104 = vpack.c.b16 %v844, %v840
    %v1105 = vpack.c.b16 %v845, %v841
    %v1106 = vpack.c.b16 %v850, %v846
    %v1107 = vpack.c.b16 %v851, %v847
    %v1108 = vpack.c.b16 %v852, %v848
    %v1109 = vpack.c.b16 %v853, %v849
    %v1110 = vpack.c.b16 %v858, %v854
    %v1111 = vpack.c.b16 %v859, %v855
    %v1112 = vpack.c.b16 %v860, %v856
    %v1113 = vpack.c.b16 %v861, %v857
    %v1114 = vpack.c.b16 %v866, %v862
    %v1115 = vpack.c.b16 %v867, %v863
    %v1116 = vpack.c.b16 %v868, %v864
    %v1117 = vpack.c.b16 %v869, %v865
    %v1118 = vpack.c.b16 %v874, %v870
    %v1119 = vpack.c.b16 %v875, %v871
    %v1120 = vpack.c.b16 %v876, %v872
    %v1121 = vpack.c.b16 %v877, %v873
    %v1122 = vpack.c.b16 %v882, %v878
    %v1123 = vpack.c.b16 %v883, %v879
    %v1124 = vpack.c.b16 %v884, %v880
    %v1125 = vpack.c.b16 %v885, %v881
    %v1126 = vpack.c.b16 %v890, %v886
    %v1127 = vpack.c.b16 %v891, %v887
    %v1128 = vpack.c.b16 %v892, %v888
    %v1129 = vpack.c.b16 %v893, %v889
    %v1130 = vpack.c.b16 %v898, %v894
    %v1131 = vpack.c.b16 %v899, %v895
    %v1132 = vpack.c.b16 %v900, %v896
    %v1133 = vpack.c.b16 %v901, %v897
    %v1134 = vpack.c.b16 %v906, %v902
    %v1135 = vpack.c.b16 %v907, %v903
    %v1136 = vpack.c.b16 %v908, %v904
    %v1137 = vpack.c.b16 %v909, %v905
    %v1138 = vpack.c.b16 %v914, %v910
    %v1139 = vpack.c.b16 %v915, %v911
    %v1140 = vpack.c.b16 %v916, %v912
    %v1141 = vpack.c.b16 %v917, %v913
    %v1142 = vpack.c.b16 %v922, %v918
    %v1143 = vpack.c.b16 %v923, %v919
    %v1144 = vpack.c.b16 %v924, %v920
    %v1145 = vpack.c.b16 %v925, %v921
    %v1146 = vpack.c.b16 %v930, %v926
    %v1147 = vpack.c.b16 %v931, %v927
    %v1148 = vpack.c.b16 %v932, %v928
    %v1149 = vpack.c.b16 %v933, %v929
    %v1150 = vpack.c.b16 %v938, %v934
    %v1151 = vpack.c.b16 %v939, %v935
    %v1152 = vpack.c.b16 %v940, %v936
    %v1153 = vpack.c.b16 %v941, %v937
    %v1154 = vpack.c.b16 %v946, %v942
    %v1155 = vpack.c.b16 %v947, %v943
    %v1156 = vpack.c.b16 %v948, %v944
    %v1157 = vpack.c.b16 %v949, %v945
    %v1158 = vpack.c.b16 %v954, %v950
    %v1159 = vpack.c.b16 %v955, %v951
    %v1160 = vpack.c.b16 %v956, %v952
    %v1161 = vpack.c.b16 %v957, %v953
    %v1162 = vpack.c.b16 %v962, %v958
    %v1163 = vpack.c.b16 %v963, %v959
    %v1164 = vpack.c.b16 %v964, %v960
    %v1165 = vpack.c.b16 %v965, %v961
    %v1166 = vpack.c.b16 %v970, %v966
    %v1167 = vpack.c.b16 %v971, %v967
    %v1168 = vpack.c.b16 %v972, %v968
    %v1169 = vpack.c.b16 %v973, %v969
    %vm1366 = vcmask 130048
    %v1368 = vsel %vm1366, %v91, 0
    %1370 = vmatprep.subr.bf16.mxu0 %v975
    %1371 = vmatpush1.bf16.msra.mxu0 %v974
    %1372 = vmatprep.subr.bf16.mxu0 %v979
    %1373 = vmatpush1.bf16.msra.mxu0 %v978
    %1374 = vmatprep.subr.bf16.mxu0 %v983
    %1375 = vmatpush1.bf16.msra.mxu0 %v982
    %1376 = vmatprep.subr.bf16.mxu0 %v987
    %1377 = vmatpush1.bf16.msra.mxu0 %v986
    %1378 = vmatprep.subr.bf16.mxu0 %v991
    %1379 = vmatpush1.bf16.msra.mxu0 %v990
    %1380 = vmatprep.subr.bf16.mxu0 %v995
    %1381 = vmatpush1.bf16.msra.mxu0 %v994
    %1382 = vmatprep.subr.bf16.mxu0 %v999
    %1383 = vmatpush1.bf16.msra.mxu0 %v998
    %1384 = vmatprep.subr.bf16.mxu0 %v1003
    %1385 = vmatpush1.bf16.msra.mxu0 %v1002
    %1386 = vmatprep.subr.bf16.mxu0 %v1007
    %1387 = vmatpush1.bf16.msra.mxu0 %v1006
    %1388 = vmatprep.subr.bf16.mxu0 %v1011
    %1389 = vmatpush1.bf16.msra.mxu0 %v1010
    %1390 = vmatprep.subr.bf16.mxu0 %v1015
    %1391 = vmatpush1.bf16.msra.mxu0 %v1014
    %1392 = vmatprep.subr.bf16.mxu0 %v1019
    %1393 = vmatpush1.bf16.msra.mxu0 %v1018
    %1394 = vmatprep.subr.bf16.mxu0 %v1023
    %1395 = vmatpush1.bf16.msra.mxu0 %v1022
    %1396 = vmatprep.subr.bf16.mxu0 %v1027
    %1397 = vmatpush1.bf16.msra.mxu0 %v1026
    %1398 = vmatprep.subr.bf16.mxu0 %v1031
    %1399 = vmatpush1.bf16.msra.mxu0 %v1030
    %1400 = vmatprep.subr.bf16.mxu0 %v1035
    %1401 = vmatpush1.bf16.msra.mxu0 %v1034
    %1402 = vmatprep.mubr.bf16.mxu0 %v86
    %1403 = vmatmul.mubr.bf16.gmra.mrb[0].mxu0 %v85
    %v1404 = vpop.f32.mrb[0].mxu0
    %v1405 = vadd.f32 0.0, %v1404
    %v1406 = vpop.f32.mrb[0].mxu0
    %v1407 = vadd.f32 0.0, %v1406
    %v1408 = vpop.f32.mrb[0].mxu0
    %v1409 = vpop.f32.mrb[0].mxu0
    %1410 = vdwg.mxu0
    %1411 = vmatprep.subr.bf16.mxu0 %v1039
    %1412 = vmatpush1.bf16.msra.mxu0 %v1038
    %1413 = vmatprep.subr.bf16.mxu0 %v1043
    %1414 = vmatpush1.bf16.msra.mxu0 %v1042
    %1415 = vmatprep.subr.bf16.mxu0 %v1047
    %1416 = vmatpush1.bf16.msra.mxu0 %v1046
    %1417 = vmatprep.subr.bf16.mxu0 %v1051
    %1418 = vmatpush1.bf16.msra.mxu0 %v1050
    %1419 = vmatprep.subr.bf16.mxu0 %v1055
    %1420 = vmatpush1.bf16.msra.mxu0 %v1054
    %1421 = vmatprep.subr.bf16.mxu0 %v1059
    %1422 = vmatpush1.bf16.msra.mxu0 %v1058
    %1423 = vmatprep.subr.bf16.mxu0 %v1063
    %1424 = vmatpush1.bf16.msra.mxu0 %v1062
    %1425 = vmatprep.subr.bf16.mxu0 %v1067
    %1426 = vmatpush1.bf16.msra.mxu0 %v1066
    %1427 = vmatprep.subr.bf16.mxu0 %v1071
    %1428 = vmatpush1.bf16.msra.mxu0 %v1070
    %1429 = vmatprep.subr.bf16.mxu0 %v1075
    %1430 = vmatpush1.bf16.msra.mxu0 %v1074
    %1431 = vmatprep.subr.bf16.mxu0 %v1079
    %1432 = vmatpush1.bf16.msra.mxu0 %v1078
    %1433 = vmatprep.subr.bf16.mxu0 %v1083
    %1434 = vmatpush1.bf16.msra.mxu0 %v1082
    %1435 = vmatprep.subr.bf16.mxu0 %v1087
    %1436 = vmatpush1.bf16.msra.mxu0 %v1086
    %1437 = vmatprep.subr.bf16.mxu0 %v1091
    %1438 = vmatpush1.bf16.msra.mxu0 %v1090
    %1439 = vmatprep.subr.bf16.mxu0 %v1095
    %1440 = vmatpush1.bf16.msra.mxu0 %v1094
    %1441 = vmatprep.subr.bf16.mxu0 %v1099
    %1442 = vmatpush1.bf16.msra.mxu0 %v1098
    %1443 = vmatprep.mubr.bf16.mxu0 %v88
    %1444 = vmatmul.mubr.bf16.gmra.mrb[0].mxu0 %v87
    %v1445 = vpop.f32.mrb[0].mxu0
    %v1446 = vadd.f32 %v1405, %v1445
    %v1447 = vpop.f32.mrb[0].mxu0
    %v1448 = vadd.f32 %v1407, %v1447
    %v1449 = vpop.f32.mrb[0].mxu0
    %v1450 = vpop.f32.mrb[0].mxu0
    %1451 = vdwg.mxu0
    %1452 = vmatprep.subr.bf16.mxu0 %v1103
    %1453 = vmatpush1.bf16.msra.mxu0 %v1102
    %1454 = vmatprep.subr.bf16.mxu0 %v1107
    %1455 = vmatpush1.bf16.msra.mxu0 %v1106
    %1456 = vmatprep.subr.bf16.mxu0 %v1111
    %1457 = vmatpush1.bf16.msra.mxu0 %v1110
    %1458 = vmatprep.subr.bf16.mxu0 %v1115
    %1459 = vmatpush1.bf16.msra.mxu0 %v1114
    %1460 = vmatprep.subr.bf16.mxu0 %v1119
    %1461 = vmatpush1.bf16.msra.mxu0 %v1118
    %1462 = vmatprep.subr.bf16.mxu0 %v1123
    %1463 = vmatpush1.bf16.msra.mxu0 %v1122
    %1464 = vmatprep.subr.bf16.mxu0 %v1127
    %1465 = vmatpush1.bf16.msra.mxu0 %v1126
    %1466 = vmatprep.subr.bf16.mxu0 %v1131
    %1467 = vmatpush1.bf16.msra.mxu0 %v1130
    %1468 = vmatprep.subr.bf16.mxu0 %v1135
    %1469 = vmatpush1.bf16.msra.mxu0 %v1134
    %1470 = vmatprep.subr.bf16.mxu0 %v1139
    %1471 = vmatpush1.bf16.msra.mxu0 %v1138
    %1472 = vmatprep.subr.bf16.mxu0 %v1143
    %1473 = vmatpush1.bf16.msra.mxu0 %v1142
    %1474 = vmatprep.subr.bf16.mxu0 %v1147
    %1475 = vmatpush1.bf16.msra.mxu0 %v1146
    %1476 = vmatprep.subr.bf16.mxu0 %v1151
    %1477 = vmatpush1.bf16.msra.mxu0 %v1150
    %1478 = vmatprep.subr.bf16.mxu0 %v1155
    %1479 = vmatpush1.bf16.msra.mxu0 %v1154
    %1480 = vmatprep.subr.bf16.mxu0 %v1159
    %1481 = vmatpush1.bf16.msra.mxu0 %v1158
    %1482 = vmatprep.subr.bf16.mxu0 %v1163
    %1483 = vmatpush1.bf16.msra.mxu0 %v1162
    %1484 = vmatprep.mubr.bf16.mxu0 %v90
    %1485 = vmatmul.mubr.bf16.gmra.mrb[0].mxu0 %v89
    %v1486 = vpop.f32.mrb[0].mxu0
    %v1487 = vadd.f32 %v1446, %v1486
    %v1488 = vpop.f32.mrb[0].mxu0
    %v1489 = vadd.f32 %v1448, %v1488
    %v1490 = vpop.f32.mrb[0].mxu0
    %v1491 = vpop.f32.mrb[0].mxu0
    %1492 = vdwg.mxu0
    %1493 = vmatprep.subr.bf16.mxu0 %v1167
    %1494 = vmatpush1.bf16.msra.mxu0 %v1166
    %1495 = vmatprep.subr.bf16.mxu0 0
    %1496 = vmatpush1.bf16.msra.mxu0 0
    %1497 = vmatprep.subr.bf16.mxu0 0
    %1498 = vmatpush1.bf16.msra.mxu0 0
    %1499 = vmatprep.subr.bf16.mxu0 0
    %1500 = vmatpush1.bf16.msra.mxu0 0
    %1501 = vmatprep.subr.bf16.mxu0 0
    %1502 = vmatpush1.bf16.msra.mxu0 0
    %1503 = vmatprep.subr.bf16.mxu0 0
    %1504 = vmatpush1.bf16.msra.mxu0 0
    %1505 = vmatprep.subr.bf16.mxu0 0
    %1506 = vmatpush1.bf16.msra.mxu0 0
    %1507 = vmatprep.subr.bf16.mxu0 0
    %1508 = vmatpush1.bf16.msra.mxu0 0
    %1509 = vmatprep.subr.bf16.mxu0 0
    %1510 = vmatpush1.bf16.msra.mxu0 0
    %1511 = vmatprep.subr.bf16.mxu0 0
    %1512 = vmatpush1.bf16.msra.mxu0 0
    %1513 = vmatprep.subr.bf16.mxu0 0
    %1514 = vmatpush1.bf16.msra.mxu0 0
    %1515 = vmatprep.subr.bf16.mxu0 0
    %1516 = vmatpush1.bf16.msra.mxu0 0
    %1517 = vmatprep.subr.bf16.mxu0 0
    %1518 = vmatpush1.bf16.msra.mxu0 0
    %1519 = vmatprep.subr.bf16.mxu0 0
    %1520 = vmatpush1.bf16.msra.mxu0 0
    %1521 = vmatprep.subr.bf16.mxu0 0
    %1522 = vmatpush1.bf16.msra.mxu0 0
    %1523 = vmatprep.subr.bf16.mxu0 0
    %1524 = vmatpush1.bf16.msra.mxu0 0
    %1525 = vmatprep.mubr.bf16.mxu0 0
    %1526 = vmatmul.mubr.bf16.gmra.mrb[0].mxu0 %v1368
    %v1527 = vpop.f32.mrb[0].mxu0
    %v1528 = vadd.f32 %v1487, %v1527
    %v1529 = vpop.f32.mrb[0].mxu0
    %v1530 = vadd.f32 %v1489, %v1529
    %v1531 = vpop.f32.mrb[0].mxu0
    %v1532 = vpop.f32.mrb[0].mxu0
    %1533 = vdwg.mxu0
    %1534 = vmatprep.subr.bf16.mxu0 %v977
    %1535 = vmatpush1.bf16.msra.mxu0 %v976
    %1536 = vmatprep.subr.bf16.mxu0 %v981
    %1537 = vmatpush1.bf16.msra.mxu0 %v980
    %1538 = vmatprep.subr.bf16.mxu0 %v985
    %1539 = vmatpush1.bf16.msra.mxu0 %v984
    %1540 = vmatprep.subr.bf16.mxu0 %v989
    %1541 = vmatpush1.bf16.msra.mxu0 %v988
    %1542 = vmatprep.subr.bf16.mxu0 %v993
    %1543 = vmatpush1.bf16.msra.mxu0 %v992
    %1544 = vmatprep.subr.bf16.mxu0 %v997
    %1545 = vmatpush1.bf16.msra.mxu0 %v996
    %1546 = vmatprep.subr.bf16.mxu0 %v1001
    %1547 = vmatpush1.bf16.msra.mxu0 %v1000
    %1548 = vmatprep.subr.bf16.mxu0 %v1005
    %1549 = vmatpush1.bf16.msra.mxu0 %v1004
    %1550 = vmatprep.subr.bf16.mxu0 %v1009
    %1551 = vmatpush1.bf16.msra.mxu0 %v1008
    %1552 = vmatprep.subr.bf16.mxu0 %v1013
    %1553 = vmatpush1.bf16.msra.mxu0 %v1012
    %1554 = vmatprep.subr.bf16.mxu0 %v1017
    %1555 = vmatpush1.bf16.msra.mxu0 %v1016
    %1556 = vmatprep.subr.bf16.mxu0 %v1021
    %1557 = vmatpush1.bf16.msra.mxu0 %v1020
    %1558 = vmatprep.subr.bf16.mxu0 %v1025
    %1559 = vmatpush1.bf16.msra.mxu0 %v1024
    %1560 = vmatprep.subr.bf16.mxu0 %v1029
    %1561 = vmatpush1.bf16.msra.mxu0 %v1028
    %1562 = vmatprep.subr.bf16.mxu0 %v1033
    %1563 = vmatpush1.bf16.msra.mxu0 %v1032
    %1564 = vmatprep.subr.bf16.mxu0 %v1037
    %1565 = vmatpush1.bf16.msra.mxu0 %v1036
    %1566 = vmatprep.mubr.bf16.mxu0 %v86
    %1567 = vmatmul.mubr.bf16.gmra.mrb[0].mxu0 %v85
    %v1568 = vpop.f32.mrb[0].mxu0
    %v1569 = vadd.f32 0.0, %v1568
    %v1570 = vpop.f32.mrb[0].mxu0
    %v1571 = vadd.f32 0.0, %v1570
    %v1572 = vpop.f32.mrb[0].mxu0
    %v1573 = vpop.f32.mrb[0].mxu0
    %1574 = vdwg.mxu0
    %1575 = vmatprep.subr.bf16.mxu0 %v1041
    %1576 = vmatpush1.bf16.msra.mxu0 %v1040
    %1577 = vmatprep.subr.bf16.mxu0 %v1045
    %1578 = vmatpush1.bf16.msra.mxu0 %v1044
    %1579 = vmatprep.subr.bf16.mxu0 %v1049
    %1580 = vmatpush1.bf16.msra.mxu0 %v1048
    %1581 = vmatprep.subr.bf16.mxu0 %v1053
    %1582 = vmatpush1.bf16.msra.mxu0 %v1052
    %1583 = vmatprep.subr.bf16.mxu0 %v1057
    %1584 = vmatpush1.bf16.msra.mxu0 %v1056
    %1585 = vmatprep.subr.bf16.mxu0 %v1061
    %1586 = vmatpush1.bf16.msra.mxu0 %v1060
    %1587 = vmatprep.subr.bf16.mxu0 %v1065
    %1588 = vmatpush1.bf16.msra.mxu0 %v1064
    %1589 = vmatprep.subr.bf16.mxu0 %v1069
    %1590 = vmatpush1.bf16.msra.mxu0 %v1068
    %1591 = vmatprep.subr.bf16.mxu0 %v1073
    %1592 = vmatpush1.bf16.msra.mxu0 %v1072
    %1593 = vmatprep.subr.bf16.mxu0 %v1077
    %1594 = vmatpush1.bf16.msra.mxu0 %v1076
    %1595 = vmatprep.subr.bf16.mxu0 %v1081
    %1596 = vmatpush1.bf16.msra.mxu0 %v1080
    %1597 = vmatprep.subr.bf16.mxu0 %v1085
    %1598 = vmatpush1.bf16.msra.mxu0 %v1084
    %1599 = vmatprep.subr.bf16.mxu0 %v1089
    %1600 = vmatpush1.bf16.msra.mxu0 %v1088
    %1601 = vmatprep.subr.bf16.mxu0 %v1093
    %1602 = vmatpush1.bf16.msra.mxu0 %v1092
    %1603 = vmatprep.subr.bf16.mxu0 %v1097
    %1604 = vmatpush1.bf16.msra.mxu0 %v1096
    %1605 = vmatprep.subr.bf16.mxu0 %v1101
    %1606 = vmatpush1.bf16.msra.mxu0 %v1100
    %1607 = vmatprep.mubr.bf16.mxu0 %v88
    %1608 = vmatmul.mubr.bf16.gmra.mrb[0].mxu0 %v87
    %v1609 = vpop.f32.mrb[0].mxu0
    %v1610 = vadd.f32 %v1569, %v1609
    %v1611 = vpop.f32.mrb[0].mxu0
    %v1612 = vadd.f32 %v1571, %v1611
    %v1613 = vpop.f32.mrb[0].mxu0
    %v1614 = vpop.f32.mrb[0].mxu0
    %1615 = vdwg.mxu0
    %1616 = vmatprep.subr.bf16.mxu0 %v1105
    %1617 = vmatpush1.bf16.msra.mxu0 %v1104
    %1618 = vmatprep.subr.bf16.mxu0 %v1109
    %1619 = vmatpush1.bf16.msra.mxu0 %v1108
    %1620 = vmatprep.subr.bf16.mxu0 %v1113
    %1621 = vmatpush1.bf16.msra.mxu0 %v1112
    %1622 = vmatprep.subr.bf16.mxu0 %v1117
    %1623 = vmatpush1.bf16.msra.mxu0 %v1116
    %1624 = vmatprep.subr.bf16.mxu0 %v1121
    %1625 = vmatpush1.bf16.msra.mxu0 %v1120
    %1626 = vmatprep.subr.bf16.mxu0 %v1125
    %1627 = vmatpush1.bf16.msra.mxu0 %v1124
    %1628 = vmatprep.subr.bf16.mxu0 %v1129
    %1629 = vmatpush1.bf16.msra.mxu0 %v1128
    %1630 = vmatprep.subr.bf16.mxu0 %v1133
    %1631 = vmatpush1.bf16.msra.mxu0 %v1132
    %1632 = vmatprep.subr.bf16.mxu0 %v1137
    %1633 = vmatpush1.bf16.msra.mxu0 %v1136
    %1634 = vmatprep.subr.bf16.mxu0 %v1141
    %1635 = vmatpush1.bf16.msra.mxu0 %v1140
    %1636 = vmatprep.subr.bf16.mxu0 %v1145
    %1637 = vmatpush1.bf16.msra.mxu0 %v1144
    %1638 = vmatprep.subr.bf16.mxu0 %v1149
    %1639 = vmatpush1.bf16.msra.mxu0 %v1148
    %1640 = vmatprep.subr.bf16.mxu0 %v1153
    %1641 = vmatpush1.bf16.msra.mxu0 %v1152
    %1642 = vmatprep.subr.bf16.mxu0 %v1157
    %1643 = vmatpush1.bf16.msra.mxu0 %v1156
    %1644 = vmatprep.subr.bf16.mxu0 %v1161
    %1645 = vmatpush1.bf16.msra.mxu0 %v1160
    %1646 = vmatprep.subr.bf16.mxu0 %v1165
    %1647 = vmatpush1.bf16.msra.mxu0 %v1164
    %1648 = vmatprep.mubr.bf16.mxu0 %v90
    %1649 = vmatmul.mubr.bf16.gmra.mrb[0].mxu0 %v89
    %v1650 = vpop.f32.mrb[0].mxu0
    %v1651 = vadd.f32 %v1610, %v1650
    %v1652 = vpop.f32.mrb[0].mxu0
    %v1653 = vadd.f32 %v1612, %v1652
    %v1654 = vpop.f32.mrb[0].mxu0
    %v1655 = vpop.f32.mrb[0].mxu0
    %1656 = vdwg.mxu0
    %1657 = vmatprep.subr.bf16.mxu0 %v1169
    %1658 = vmatpush1.bf16.msra.mxu0 %v1168
    %1659 = vmatprep.subr.bf16.mxu0 0
    %1660 = vmatpush1.bf16.msra.mxu0 0
    %1661 = vmatprep.subr.bf16.mxu0 0
    %1662 = vmatpush1.bf16.msra.mxu0 0
    %1663 = vmatprep.subr.bf16.mxu0 0
    %1664 = vmatpush1.bf16.msra.mxu0 0
    %1665 = vmatprep.subr.bf16.mxu0 0
    %1666 = vmatpush1.bf16.msra.mxu0 0
    %1667 = vmatprep.subr.bf16.mxu0 0
    %1668 = vmatpush1.bf16.msra.mxu0 0
    %1669 = vmatprep.subr.bf16.mxu0 0
    %1670 = vmatpush1.bf16.msra.mxu0 0
    %1671 = vmatprep.subr.bf16.mxu0 0
    %1672 = vmatpush1.bf16.msra.mxu0 0
    %1673 = vmatprep.subr.bf16.mxu0 0
    %1674 = vmatpush1.bf16.msra.mxu0 0
    %1675 = vmatprep.subr.bf16.mxu0 0
    %1676 = vmatpush1.bf16.msra.mxu0 0
    %1677 = vmatprep.subr.bf16.mxu0 0
    %1678 = vmatpush1.bf16.msra.mxu0 0
    %1679 = vmatprep.subr.bf16.mxu0 0
    %1680 = vmatpush1.bf16.msra.mxu0 0
    %1681 = vmatprep.subr.bf16.mxu0 0
    %1682 = vmatpush1.bf16.msra.mxu0 0
    %1683 = vmatprep.subr.bf16.mxu0 0
    %1684 = vmatpush1.bf16.msra.mxu0 0
    %1685 = vmatprep.subr.bf16.mxu0 0
    %1686 = vmatpush1.bf16.msra.mxu0 0
    %1687 = vmatprep.subr.bf16.mxu0 0
    %1688 = vmatpush1.bf16.msra.mxu0 0
    %1689 = vmatprep.mubr.bf16.mxu0 0
    %1690 = vmatmul.mubr.bf16.gmra.mrb[0].mxu0 %v1368
    %v1691 = vpop.f32.mrb[0].mxu0
    %v1692 = vadd.f32 %v1651, %v1691
    %v1693 = vpop.f32.mrb[0].mxu0
    %v1694 = vadd.f32 %v1653, %v1693
    %v1695 = vpop.f32.mrb[0].mxu0
    %v1696 = vpop.f32.mrb[0].mxu0
    %1697 = vdwg.mxu0
    %v1698 = vld [vmem:[%s2] sm:$0xf]
    %v1700 = vlaneseq
    %v1701 = vshrl.u32 %v1700, 7
    %v1702 = vsub.s32 0, %v1701
    %v1703 = vrot.slane %v1698, %v1702
    %v1704 = vlaneseq
    %v1705 = vshrl.u32 %v1704, 7
    %v1706 = vsub.s32 1, %v1705
    %v1707 = vrot.slane %v1698, %v1706
    %v1708 = vlaneseq
    %v1709 = vshrl.u32 %v1708, 7
    %v1710 = vsub.s32 2, %v1709
    %v1711 = vrot.slane %v1698, %v1710
    %v1712 = vlaneseq
    %v1713 = vshrl.u32 %v1712, 7
    %v1714 = vsub.s32 3, %v1713
    %v1715 = vrot.slane %v1698, %v1714
    %v1720 = vmul.f32 %v1528, %v1703
    %v1721 = vmul.f32 %v1530, %v1707
    %v1722 = vmul.f32 %v1692, %v1711
    %v1723 = vmul.f32 %v1694, %v1715
    %v1724 = vld [vmem:[#allocation6] sm:$0xf]
    %v1726 = vlaneseq
    %v1727 = vshrl.u32 %v1726, 7
    %v1728 = vsub.s32 0, %v1727
    %v1729 = vrot.slane %v1724, %v1728
    %v1730 = vlaneseq
    %v1731 = vshrl.u32 %v1730, 7
    %v1732 = vsub.s32 1, %v1731
    %v1733 = vrot.slane %v1724, %v1732
    %v1734 = vlaneseq
    %v1735 = vshrl.u32 %v1734, 7
    %v1736 = vsub.s32 2, %v1735
    %v1737 = vrot.slane %v1724, %v1736
    %v1738 = vlaneseq
    %v1739 = vshrl.u32 %v1738, 7
    %v1740 = vsub.s32 3, %v1739
    %v1741 = vrot.slane %v1724, %v1740
    %v1746 = vadd.f32 %v1720, %v1729
    %v1747 = vadd.f32 %v1721, %v1733
    %v1748 = vadd.f32 %v1722, %v1737
    %v1749 = vadd.f32 %v1723, %v1741
    %v1750 = vmax.f32 %v1746, 0.0
    %v1751 = vmax.f32 %v1747, 0.0
    %v1752 = vmax.f32 %v1748, 0.0
    %v1753 = vmax.f32 %v1749, 0.0
    %v1754 = vld [vmem:[#allocation7] sm:$0xff]
    %v1755 = vld [vmem:[#allocation7 + $0x8] sm:$0xff]
    %v1756 = vld [vmem:[#allocation7 + $0x10] sm:$0xff]
    %v1757 = vld [vmem:[#allocation7 + $0x18] sm:$0xff]
    %v1758 = vld [vmem:[#allocation7 + $0x20] sm:$0xff]
    %v1759 = vld [vmem:[#allocation7 + $0x28] sm:$0xff]
    %v1760 = vld [vmem:[#allocation7 + $0x30] sm:$0xff]
    %v1761 = vld [vmem:[#allocation7 + $0x38] sm:$0xff]
    %v1762 = vld [vmem:[#allocation7 + $0x40] sm:$0xff]
    %v1763 = vld [vmem:[#allocation7 + $0x48] sm:$0xff]
    %v1764 = vld [vmem:[#allocation7 + $0x50] sm:$0xff]
    %v1765 = vld [vmem:[#allocation7 + $0x58] sm:$0xff]
    %v1766 = vld [vmem:[#allocation7 + $0x60] sm:$0xff]
    %v1767 = vld [vmem:[#allocation7 + $0x68] sm:$0xff]
    %v1768 = vld [vmem:[#allocation7 + $0x70] sm:$0xff]
    %v1769 = vld [vmem:[#allocation7 + $0x78] sm:$0xff]
    %v1770 = vunpack.c.l.s8.bf16 %v1754
    %v1771 = vunpack.c.h.s8.bf16 %v1754
    %v1772 = vunpack.c.l.s8.bf16 %v1755
    %v1773 = vunpack.c.h.s8.bf16 %v1755
    %v1774 = vunpack.c.l.s8.bf16 %v1756
    %v1775 = vunpack.c.h.s8.bf16 %v1756
    %v1776 = vunpack.c.l.s8.bf16 %v1757
    %v1777 = vunpack.c.h.s8.bf16 %v1757
    %v1778 = vunpack.c.l.s8.bf16 %v1758
    %v1779 = vunpack.c.h.s8.bf16 %v1758
    %v1780 = vunpack.c.l.s8.bf16 %v1759
    %v1781 = vunpack.c.h.s8.bf16 %v1759
    %v1782 = vunpack.c.l.s8.bf16 %v1760
    %v1783 = vunpack.c.h.s8.bf16 %v1760
    %v1784 = vunpack.c.l.s8.bf16 %v1761
    %v1785 = vunpack.c.h.s8.bf16 %v1761
    %v1786 = vunpack.c.l.s8.bf16 %v1762
    %v1787 = vunpack.c.h.s8.bf16 %v1762
    %v1788 = vunpack.c.l.s8.bf16 %v1763
    %v1789 = vunpack.c.h.s8.bf16 %v1763
    %v1790 = vunpack.c.l.s8.bf16 %v1764
    %v1791 = vunpack.c.h.s8.bf16 %v1764
    %v1792 = vunpack.c.l.s8.bf16 %v1765
    %v1793 = vunpack.c.h.s8.bf16 %v1765
    %v1794 = vunpack.c.l.s8.bf16 %v1766
    %v1795 = vunpack.c.h.s8.bf16 %v1766
    %v1796 = vunpack.c.l.s8.bf16 %v1767
    %v1797 = vunpack.c.h.s8.bf16 %v1767
    %v1798 = vunpack.c.l.s8.bf16 %v1768
    %v1799 = vunpack.c.h.s8.bf16 %v1768
    %v1800 = vunpack.c.l.s8.bf16 %v1769
    %v1801 = vunpack.c.h.s8.bf16 %v1769
    %v1802 = vpack.c.bf16 %v1750, %v1750
    %v1803 = vpack.c.bf16 %v1751, %v1751
    %v1804 = vpack.c.bf16 %v1752, %v1752
    %v1805 = vpack.c.bf16 %v1753, %v1753
    %1806 = vmatprep.subr.bf16.mxu0 0
    %1807 = vmatpush1.bf16.msra.mxu0 %v1770
    %1808 = vmatprep.subr.bf16.mxu0 0
    %1809 = vmatpush1.bf16.msra.mxu0 %v1771
    %1810 = vmatprep.subr.bf16.mxu0 0
    %1811 = vmatpush1.bf16.msra.mxu0 %v1772
    %1812 = vmatprep.subr.bf16.mxu0 0
    %1813 = vmatpush1.bf16.msra.mxu0 %v1773
    %1814 = vmatprep.subr.bf16.mxu0 0
    %1815 = vmatpush1.bf16.msra.mxu0 %v1774
    %1816 = vmatprep.subr.bf16.mxu0 0
    %1817 = vmatpush1.bf16.msra.mxu0 %v1775
    %1818 = vmatprep.subr.bf16.mxu0 0
    %1819 = vmatpush1.bf16.msra.mxu0 %v1776
    %1820 = vmatprep.subr.bf16.mxu0 0
    %1821 = vmatpush1.bf16.msra.mxu0 %v1777
    %1822 = vmatprep.subr.bf16.mxu0 0
    %1823 = vmatpush1.bf16.msra.mxu0 %v1778
    %1824 = vmatprep.subr.bf16.mxu0 0
    %1825 = vmatpush1.bf16.msra.mxu0 %v1779
    %1826 = vmatprep.subr.bf16.mxu0 0
    %1827 = vmatpush1.bf16.msra.mxu0 %v1780
    %1828 = vmatprep.subr.bf16.mxu0 0
    %1829 = vmatpush1.bf16.msra.mxu0 %v1781
    %1830 = vmatprep.subr.bf16.mxu0 0
    %1831 = vmatpush1.bf16.msra.mxu0 %v1782
    %1832 = vmatprep.subr.bf16.mxu0 0
    %1833 = vmatpush1.bf16.msra.mxu0 %v1783
    %1834 = vmatprep.subr.bf16.mxu0 0
    %1835 = vmatpush1.bf16.msra.mxu0 %v1784
    %1836 = vmatprep.subr.bf16.mxu0 0
    %1837 = vmatpush1.bf16.msra.mxu0 %v1785
    %1838 = vmatprep.mubr.bf16.mxu0 %v1803
    %1839 = vmatmul.mubr.bf16.gmra.mrb[0].mxu0 %v1802
    %v1840 = vpop.f32.mrb[0].mxu0
    %v1841 = vadd.f32 0.0, %v1840
    %v1842 = vpop.f32.mrb[0].mxu0
    %v1843 = vpop.f32.mrb[0].mxu0
    %v1844 = vpop.f32.mrb[0].mxu0
    %1845 = vdwg.mxu0
    %1846 = vmatprep.subr.bf16.mxu0 0
    %1847 = vmatpush1.bf16.msra.mxu0 %v1786
    %1848 = vmatprep.subr.bf16.mxu0 0
    %1849 = vmatpush1.bf16.msra.mxu0 %v1787
    %1850 = vmatprep.subr.bf16.mxu0 0
    %1851 = vmatpush1.bf16.msra.mxu0 %v1788
    %1852 = vmatprep.subr.bf16.mxu0 0
    %1853 = vmatpush1.bf16.msra.mxu0 %v1789
    %1854 = vmatprep.subr.bf16.mxu0 0
    %1855 = vmatpush1.bf16.msra.mxu0 %v1790
    %1856 = vmatprep.subr.bf16.mxu0 0
    %1857 = vmatpush1.bf16.msra.mxu0 %v1791
    %1858 = vmatprep.subr.bf16.mxu0 0
    %1859 = vmatpush1.bf16.msra.mxu0 %v1792
    %1860 = vmatprep.subr.bf16.mxu0 0
    %1861 = vmatpush1.bf16.msra.mxu0 %v1793
    %1862 = vmatprep.subr.bf16.mxu0 0
    %1863 = vmatpush1.bf16.msra.mxu0 %v1794
    %1864 = vmatprep.subr.bf16.mxu0 0
    %1865 = vmatpush1.bf16.msra.mxu0 %v1795
    %1866 = vmatprep.subr.bf16.mxu0 0
    %1867 = vmatpush1.bf16.msra.mxu0 %v1796
    %1868 = vmatprep.subr.bf16.mxu0 0
    %1869 = vmatpush1.bf16.msra.mxu0 %v1797
    %1870 = vmatprep.subr.bf16.mxu0 0
    %1871 = vmatpush1.bf16.msra.mxu0 %v1798
    %1872 = vmatprep.subr.bf16.mxu0 0
    %1873 = vmatpush1.bf16.msra.mxu0 %v1799
    %1874 = vmatprep.subr.bf16.mxu0 0
    %1875 = vmatpush1.bf16.msra.mxu0 %v1800
    %1876 = vmatprep.subr.bf16.mxu0 0
    %1877 = vmatpush1.bf16.msra.mxu0 %v1801
    %1878 = vmatprep.mubr.bf16.mxu0 %v1805
    %1879 = vmatmul.mubr.bf16.gmra.mrb[0].mxu0 %v1804
    %v1880 = vpop.f32.mrb[0].mxu0
    %v1881 = vadd.f32 %v1841, %v1880
    %v1882 = vpop.f32.mrb[0].mxu0
    %v1883 = vpop.f32.mrb[0].mxu0
    %v1884 = vpop.f32.mrb[0].mxu0
    %1885 = vdwg.mxu0
    %v1886 = vld [vmem:[%s5] sm:$0x1]
    %v1888 = vlaneseq
    %v1889 = vshrl.u32 %v1888, 7
    %v1890 = vsub.s32 0, %v1889
    %v1891 = vrot.slane %v1886, %v1890
    %v1893 = vmul.f32 %v1881, %v1891
    %v1894 = vld [vmem:[%s6] sm:$0x1]
    %v1896 = vlaneseq
    %v1897 = vshrl.u32 %v1896, 7
    %v1898 = vsub.s32 0, %v1897
    %v1899 = vrot.slane %v1894, %v1898
    %v1901 = vadd.f32 %v1893, %v1899
    %1902 = vst [vmem:[%s7] sm:$0xff] %v1901
    // Predicated region
    $region46: #{encoder_forward.1} parent=1 // pred_check
      _
    $region47: #{encoder_forward.1} parent=1 // pred_check_branch
      %1904 = sbr.rel (0) target = $region49
    $region48: #{encoder_forward.1} parent=1 // pred_region
      _
    $region49: #{encoder_forward.1} parent=1 // pred_fallthru
      _
    // Predicated region
    $region50: #{encoder_forward.1} parent=1 // pred_check
      _
    $region51: #{encoder_forward.1} parent=1 // pred_check_branch
      %1906 = sbr.rel (0) target = $region53
    $region52: #{encoder_forward.1} parent=1 // pred_region
      _
    $region53: #{encoder_forward.1} parent=1 // pred_fallthru
      _
    %1907 = vsyncpa [#allocation3], 1
    %1908 = vsyncpa [#allocation5], 1
    %1909 = vsyncpa [#allocation8], 1

</llo_original>
